<compile_context>
chip_gen: v7x
topology: tpu7x:2x2x1
jax: 0.10.0
libtpu: 0.0.40
codegen_flags: <defaults>
</compile_context>

<pallas_src>
import jax
import jax.numpy as jnp
from jax.experimental import pallas as pl
from jax.experimental.pallas import tpu as pltpu


# ---------------------------------------------------------------------------
# Fused BPcmHead kernel (one grid step per batch element)
# ---------------------------------------------------------------------------

def _make_bpcm_kernel(C, L, K, pools, n_fc, start, L_out):
    n_reps = len(pools)
    pad_l = (K - 1) // 2
    pad_r = K - 1 - pad_l
    Lf = L
    for pz in pools:
        Lf //= pz

    def kernel(*refs):
        # inputs: x, bias, prof_w, prof_b, [conv_w, conv_b]*n_reps,
        #         [fc_w, fc_b]*n_fc, out_w, out_b
        # outputs: profile (1,T,L_out), scalar (1,1,T)
        # scratch: act (L+K-1, C)
        x_ref, bias_ref, pw_ref, pb_ref = refs[0:4]
        p = 4
        conv_refs = refs[p:p + 2 * n_reps]; p += 2 * n_reps
        fc_refs = refs[p:p + 2 * n_fc]; p += 2 * n_fc
        ow_ref, ob_ref = refs[p], refs[p + 1]; p += 2
        prof_ref, scal_ref = refs[p], refs[p + 1]; p += 2
        act_ref = refs[p]

        xb = x_ref[0]          # (C, L) f32, NCL block
        brow = bias_ref[0]     # (1, L) f32

        # ---------------- profile head: pointwise conv on the center crop ---
        # (x must be read in full for the scalar head, so the crop is a cheap
        #  in-VMEM lane slice rather than a separate DMA window.)
        xc = xb[:, start:start + L_out].astype(jnp.bfloat16)        # (C, L_out)
        pw = pw_ref[...].astype(jnp.bfloat16)                        # (T, C)
        prof = jnp.dot(pw, xc, preferred_element_type=jnp.float32)   # (T, L_out)
        prof = prof + pb_ref[...] + brow[:, start:start + L_out]
        prof_ref[0] = prof.astype(prof_ref.dtype)

        # ---------------- scalar head: conv+ReLU+maxpool stack (NLC) --------
        # Single in-kernel transpose puts the sequence axis on sublanes so all
        # padding / pooling access is sublane-sliced (cheap, well-supported).
        if pad_l > 0:
            act_ref[0:pad_l, :] = jnp.zeros((pad_l, C), jnp.float32)  # once
        act_ref[pad_l:pad_l + L, :] = xb.T                            # (L, C)
        if pad_r > 0:
            act_ref[pad_l + L:pad_l + L + pad_r, :] = jnp.zeros(
                (pad_r, C), jnp.float32)

        Lc = L
        pooled = None
        for r in range(n_reps):
            w_r = conv_refs[2 * r]              # (K, C, C) ref
            cb_r = conv_refs[2 * r + 1][...]    # (1, C)
            # conv1d 'same' as K shifted MXU dots (accumulator starts at tap 0)
            acc = jnp.dot(act_ref[0:Lc, :].astype(jnp.bfloat16),
                          w_r[0].astype(jnp.bfloat16),
                          preferred_element_type=jnp.float32)
            for k in range(1, K):
                acc = acc + jnp.dot(act_ref[k:k + Lc, :].astype(jnp.bfloat16),
                                    w_r[k].astype(jnp.bfloat16),
                                    preferred_element_type=jnp.float32)
            acc = jnp.maximum(acc + cb_r, 0.0)                        # (Lc, C)

            # maxpool along the sequence axis (PyTorch remainder truncation)
            pool = pools[r]
            Lp = Lc // pool
            act_ref[pad_l:pad_l + Lc, :] = acc          # one contiguous store
            pooled = act_ref[pl.ds(pad_l, Lp, stride=pool), :]
            for j in range(1, pool):
                pooled = jnp.maximum(
                    pooled, act_ref[pl.ds(pad_l + j, Lp, stride=pool), :])

            if r + 1 < n_reps:
                act_ref[pad_l:pad_l + Lp, :] = pooled
                if pad_r > 0:
                    act_ref[pad_l + Lp:pad_l + Lp + pad_r, :] = jnp.zeros(
                        (pad_r, C), jnp.float32)
            Lc = Lp

        # ---------------- FC stack (f32 operands, per-batch M=1) ------------
        # FC1 contracts the pooled (Lf, C) activation against the FC1 weight
        # pre-permuted on the host to (Lf, C, H) (PyTorch channel-major
        # flatten order) -- no in-kernel flatten / masked stores needed.
        fc1_w_ref, fc1_b = fc_refs[0], fc_refs[1][...]
        y = jnp.dot(pooled[0:1, :], fc1_w_ref[0],
                    preferred_element_type=jnp.float32)              # (1, H)
        for l in range(1, Lf):
            y = y + jnp.dot(pooled[l:l + 1, :], fc1_w_ref[l],
                            preferred_element_type=jnp.float32)
        y = jnp.maximum(y + fc1_b, 0.0)
        for i in range(1, n_fc):
            wf = fc_refs[2 * i][...]
            fb = fc_refs[2 * i + 1][...]
            y = jnp.maximum(
                jnp.dot(y, wf, preferred_element_type=jnp.float32) + fb, 0.0)
        y = jnp.dot(y, ow_ref[...], preferred_element_type=jnp.float32)
        y = y + ob_ref[...]

        # bias_feat fused into the kernel (same VMEM bias block as the profile)
        bias_feat = jnp.log(1.0 + jnp.sum(jnp.abs(brow), axis=1, keepdims=True))
        scal_ref[0] = (y + bias_feat).astype(scal_ref.dtype)

    return kernel


# ---------------------------------------------------------------------------
# Host wrapper: one fused pallas_call, grid over the batch
# ---------------------------------------------------------------------------

def bpcm_head_forward(params, x_ncl, bias_ncl, cfg):
    B, C, L = x_ncl.shape
    T = params["out_w"].shape[1]
    K = cfg["K"]
    pools = tuple(cfg["pool_size"])
    n_fc = cfg["n_fc"]
    L_out = cfg["profile_out_len"]
    start = (L - L_out) // 2
    assert n_fc >= 1 and len(pools) >= 1
    Lf = L
    for pz in pools:
        Lf //= pz
    H = params["fcs"][0][0].shape[1]

    # Host-side, data-size-independent weight re-layouts (done once per call;
    # under jit these fold into constants).
    prof_w_t = params["prof_w"].T                                  # (T, C)
    prof_b_t = params["prof_b"].T                                  # (T, 1)
    fc1_w, fc1_b = params["fcs"][0]
    # channel-major flatten order: W[c*Lf + l, h] -> Wp[l, c, h]
    fc1_w_perm = fc1_w.reshape(C, Lf, H).transpose(1, 0, 2)        # (Lf, C, H)

    inputs = [x_ncl, bias_ncl, prof_w_t, prof_b_t]
    in_specs = [
        pl.BlockSpec((1, C, L), lambda b: (b, 0, 0)),
        pl.BlockSpec((1, 1, L), lambda b: (b, 0, 0)),
        pl.BlockSpec((T, C), lambda b: (0, 0)),
        pl.BlockSpec((T, 1), lambda b: (0, 0)),
    ]
    for (w, bb) in params["convs"]:
        inputs += [w, bb]
        in_specs += [pl.BlockSpec((K, C, C), lambda b: (0, 0, 0)),
                     pl.BlockSpec((1, C), lambda b: (0, 0))]
    inputs += [fc1_w_perm, fc1_b]
    in_specs += [pl.BlockSpec((Lf, C, H), lambda b: (0, 0, 0)),
                 pl.BlockSpec((1, H), lambda b: (0, 0))]
    for (w, bb) in params["fcs"][1:]:
        inputs += [w, bb]
        in_specs += [pl.BlockSpec(w.shape, lambda b: (0, 0)),
                     pl.BlockSpec(bb.shape, lambda b: (0, 0))]
    inputs += [params["out_w"], params["out_b"]]
    in_specs += [pl.BlockSpec(params["out_w"].shape, lambda b: (0, 0)),
                 pl.BlockSpec(params["out_b"].shape, lambda b: (0, 0))]

    kern = _make_bpcm_kernel(C, L, K, pools, n_fc, start, L_out)
    profile, scalar3 = pl.pallas_call(
        kern,
        out_shape=(jax.ShapeDtypeStruct((B, T, L_out), jnp.float32),
                   jax.ShapeDtypeStruct((B, 1, T), jnp.float32)),
        grid_spec=pltpu.PrefetchScalarGridSpec(
            num_scalar_prefetch=0,
            grid=(B,),
            in_specs=in_specs,
            out_specs=[pl.BlockSpec((1, T, L_out), lambda b: (b, 0, 0)),
                       pl.BlockSpec((1, 1, T), lambda b: (b, 0, 0))],
            scratch_shapes=[pltpu.VMEM((L + K - 1, C), jnp.float32)]),
        # 'parallel' batch axis: uses both TensorCores on v7x, neutral on
        # single-TC v5e/v6e.  Footprint is KBs, so no vmem_limit override.
        compiler_params=pltpu.CompilerParams(
            dimension_semantics=("parallel",)),
    )(*inputs)
    return profile, scalar3[:, 0, :]


# ---------------------------------------------------------------------------
# Plain-JAX f32 reference (PyTorch semantics incl. channel-major flatten)
# ---------------------------------------------------------------------------

def bpcm_head_reference(params, x_ncl, bias_ncl, cfg):
    B, C, L = x_ncl.shape
    L_out = cfg["profile_out_len"]
    start = (L - L_out) // 2
    x_nlc = jnp.transpose(x_ncl, (0, 2, 1))
    xc = x_nlc[:, start:start + L_out, :]
    prof = jnp.einsum("blc,ct->blt", xc, params["prof_w"]) + params["prof_b"]
    prof = prof + jnp.transpose(bias_ncl, (0, 2, 1))[:, start:start + L_out, :]
    profile = jnp.transpose(prof, (0, 2, 1))

    h = x_nlc
    for (w, b), pz in zip(params["convs"], cfg["pool_size"]):
        Bb, Lc, _ = h.shape
        K = w.shape[0]
        pad_l = (K - 1) // 2
        hp = jnp.pad(h, ((0, 0), (pad_l, K - 1 - pad_l), (0, 0)))
        out = jnp.zeros((Bb, Lc, w.shape[2]), jnp.float32)
        for k in range(K):
            out = out + jnp.einsum("blc,cd->bld", hp[:, k:k + Lc, :], w[k])
        out = jnp.maximum(out + b, 0.0)
        Lp = Lc // pz
        h = jnp.max(out[:, :Lp * pz, :].reshape(Bb, Lp, pz, -1), axis=2)
    # PyTorch flattens the NCL conv output channel-major: (B, C, Lf)->(B, C*Lf)
    flat = jnp.transpose(h, (0, 2, 1)).reshape(h.shape[0], -1)
    for (w, b) in params["fcs"]:
        flat = jnp.maximum(flat @ w + b, 0.0)
    bias_feat = jnp.log1p(jnp.sum(jnp.abs(bias_ncl), axis=(1, 2)))[:, None]
    scalar = flat @ params["out_w"] + params["out_b"] + bias_feat
    return profile, scalar


# ---------------------------------------------------------------------------
# Deterministic parameter init
# ---------------------------------------------------------------------------

def init_params(key, cfg):
    C, T, K, H = cfg["C"], cfg["T"], cfg["K"], cfg["H"]
    n_reps, n_fc = cfg["n_reps"], cfg["n_fc"]
    Lf = cfg["L"]
    for pz in cfg["pool_size"]:
        Lf //= pz
    flat_dim = Lf * C

    n_keys = 2 + 2 * n_reps + 2 * n_fc + 2
    ks = list(jax.random.split(key, n_keys))
    nxt = iter(ks)

    def rnd(shape, scale=0.1):
        return (scale * jax.random.normal(next(nxt), shape)).astype(jnp.float32)

    params = {
        "prof_w": rnd((C, T)),
        "prof_b": rnd((1, T)),
        "convs": [(rnd((K, C, C)), rnd((1, C))) for _ in range(n_reps)],
        "fcs": [],
    }
    in_dim = flat_dim
    for _ in range(n_fc):
        params["fcs"].append((rnd((in_dim, H)), rnd((1, H))))
        in_dim = H
    params["out_w"] = rnd((in_dim, T))
    params["out_b"] = rnd((1, T))
    return params


# ---------------------------------------------------------------------------
# main
# ---------------------------------------------------------------------------

if __name__ == "__main__":
    cfg = dict(
        B=2,               # batch
        C=8,               # input_channels
        L=32,              # seq_length
        T=4,               # n_celltypes
        K=3,               # conv_width
        n_reps=2,          # conv+pool blocks
        pool_size=[2, 2],  # pool_size per rep
        n_fc=2,            # scalar_head_fc_layers
        H=16,              # scalar_head_hidden_layer
        profile_out_len=16,
        bin_size=1,
    )

    key = jax.random.PRNGKey(0)
    k_param, k_x, k_bias = jax.random.split(key, 3)
    params = init_params(k_param, cfg)

    x = jax.random.normal(k_x, (cfg["B"], cfg["C"], cfg["L"]), jnp.float32)       # NCL
    bias = 0.1 * jax.random.normal(k_bias, (cfg["B"], 1, cfg["L"]), jnp.float32)  # NCL

    profile, scalar = bpcm_head_forward(params, x, bias, cfg)
    profile = jax.block_until_ready(profile)
    scalar = jax.block_until_ready(scalar)

    prof_ref, scal_ref = bpcm_head_reference(params, x, bias, cfg)
    assert profile.shape == (cfg["B"], cfg["T"], cfg["profile_out_len"])
    assert scalar.shape == (cfg["B"], cfg["T"])
    # 1e-2 absolute budget covers the bf16-operand / f32-accumulate conv and
    # profile dots (the FC stack is kept in f32) vs the pure-f32 reference.
    assert jnp.max(jnp.abs(profile - prof_ref)) < 1e-2
    assert jnp.max(jnp.abs(scalar - scal_ref)) < 1e-2

    print("KERNEL_OK")
</pallas_src>

<mosaic_0001>
module attributes {stable_mosaic.version = 11 : i64} {
  func.func @kernel(%arg0: i32, %arg1: memref<1x8x32xf32, #tpu.memory_space<vmem>>, %arg2: memref<1x1x32xf32, #tpu.memory_space<vmem>>, %arg3: memref<4x8xf32, #tpu.memory_space<vmem>>, %arg4: memref<4x1xf32, #tpu.memory_space<vmem>>, %arg5: memref<3x8x8xf32, #tpu.memory_space<vmem>>, %arg6: memref<1x8xf32, #tpu.memory_space<vmem>>, %arg7: memref<3x8x8xf32, #tpu.memory_space<vmem>>, %arg8: memref<1x8xf32, #tpu.memory_space<vmem>>, %arg9: memref<8x8x16xf32, #tpu.memory_space<vmem>>, %arg10: memref<1x16xf32, #tpu.memory_space<vmem>>, %arg11: memref<16x16xf32, #tpu.memory_space<vmem>>, %arg12: memref<1x16xf32, #tpu.memory_space<vmem>>, %arg13: memref<16x4xf32, #tpu.memory_space<vmem>>, %arg14: memref<1x4xf32, #tpu.memory_space<vmem>>, %arg15: memref<1x4x16xf32, #tpu.memory_space<vmem>>, %arg16: memref<1x1x4xf32, #tpu.memory_space<vmem>>, %arg17: memref<34x8xf32, #tpu.memory_space<vmem>>) attributes {dimension_semantics = [#tpu.dimension_semantics<parallel>], iteration_bounds = array<i64: 2>, scalar_prefetch = 0 : i64, scratch_operands = 1 : i64, tpu.core_type = #tpu.core_type<tc>, window_params = [{transform_indices = @transform_0, window_bounds = array<i64: 1, 8, 32>}, {transform_indices = @transform_1, window_bounds = array<i64: 1, 1, 32>}, {pipeline_mode = #tpu.pipeline_mode<synchronous>, transform_indices = @transform_2, window_bounds = array<i64: 4, 8>}, {pipeline_mode = #tpu.pipeline_mode<synchronous>, transform_indices = @transform_3, window_bounds = array<i64: 4, 1>}, {pipeline_mode = #tpu.pipeline_mode<synchronous>, transform_indices = @transform_4, window_bounds = array<i64: 3, 8, 8>}, {pipeline_mode = #tpu.pipeline_mode<synchronous>, transform_indices = @transform_5, window_bounds = array<i64: 1, 8>}, {pipeline_mode = #tpu.pipeline_mode<synchronous>, transform_indices = @transform_6, window_bounds = array<i64: 3, 8, 8>}, {pipeline_mode = #tpu.pipeline_mode<synchronous>, transform_indices = @transform_7, window_bounds = array<i64: 1, 8>}, {pipeline_mode = #tpu.pipeline_mode<synchronous>, transform_indices = @transform_8, window_bounds = array<i64: 8, 8, 16>}, {pipeline_mode = #tpu.pipeline_mode<synchronous>, transform_indices = @transform_9, window_bounds = array<i64: 1, 16>}, {pipeline_mode = #tpu.pipeline_mode<synchronous>, transform_indices = @transform_10, window_bounds = array<i64: 16, 16>}, {pipeline_mode = #tpu.pipeline_mode<synchronous>, transform_indices = @transform_11, window_bounds = array<i64: 1, 16>}, {pipeline_mode = #tpu.pipeline_mode<synchronous>, transform_indices = @transform_12, window_bounds = array<i64: 16, 4>}, {pipeline_mode = #tpu.pipeline_mode<synchronous>, transform_indices = @transform_13, window_bounds = array<i64: 1, 4>}, {transform_indices = @transform_14, window_bounds = array<i64: 1, 4, 16>}, {transform_indices = @transform_15, window_bounds = array<i64: 1, 1, 4>}]} {
    %c0 = arith.constant 0 : index
    %c0_0 = arith.constant 0 : index
    %c0_1 = arith.constant 0 : index
    %0 = vector.load %arg1[%c0, %c0_0, %c0_1] : memref<1x8x32xf32, #tpu.memory_space<vmem>>, vector<1x8x32xf32>
    %1 = vector.shape_cast %0 : vector<1x8x32xf32> to vector<8x32xf32>
    %c0_2 = arith.constant 0 : index
    %c0_3 = arith.constant 0 : index
    %c0_4 = arith.constant 0 : index
    %2 = vector.load %arg2[%c0_2, %c0_3, %c0_4] : memref<1x1x32xf32, #tpu.memory_space<vmem>>, vector<1x1x32xf32>
    %3 = vector.shape_cast %2 : vector<1x1x32xf32> to vector<1x32xf32>
    %4 = vector.extract_strided_slice %1 {offsets = [0, 8], sizes = [8, 16], strides = [1, 1]} : vector<8x32xf32> to vector<8x16xf32>
    %5 = arith.truncf %4 : vector<8x16xf32> to vector<8x16xbf16>
    %c0_5 = arith.constant 0 : index
    %c0_6 = arith.constant 0 : index
    %6 = vector.load %arg3[%c0_5, %c0_6] : memref<4x8xf32, #tpu.memory_space<vmem>>, vector<4x8xf32>
    %7 = arith.truncf %6 : vector<4x8xf32> to vector<4x8xbf16>
    %cst = arith.constant dense<0.000000e+00> : vector<4x16xf32>
    %8 = tpu.matmul %7, %5, %cst {dimension_numbers = #tpu.dot_dimension_numbers<[1], [0], [0], [1], [0, 0, 1, 1], [], []>} : vector<4x8xbf16>, vector<8x16xbf16>, vector<4x16xf32> -> vector<4x16xf32>
    %c0_7 = arith.constant 0 : index
    %c0_8 = arith.constant 0 : index
    %9 = vector.load %arg4[%c0_7, %c0_8] : memref<4x1xf32, #tpu.memory_space<vmem>>, vector<4x1xf32>
    %10 = vector.broadcast %9 : vector<4x1xf32> to vector<4x16xf32>
    %11 = arith.addf %8, %10 : vector<4x16xf32>
    %12 = vector.extract_strided_slice %3 {offsets = [0, 8], sizes = [1, 16], strides = [1, 1]} : vector<1x32xf32> to vector<1x16xf32>
    %13 = vector.broadcast %12 : vector<1x16xf32> to vector<4x16xf32>
    %14 = arith.addf %11, %13 : vector<4x16xf32>
    %c0_9 = arith.constant 0 : index
    %c0_10 = arith.constant 0 : index
    %c0_11 = arith.constant 0 : index
    %15 = vector.load %arg15[%c0_9, %c0_10, %c0_11] : memref<1x4x16xf32, #tpu.memory_space<vmem>>, vector<1x4x16xf32>
    %16 = vector.shape_cast %15 : vector<1x4x16xf32> to vector<4x16xf32>
    %17 = vector.shape_cast %14 : vector<4x16xf32> to vector<1x4x16xf32>
    tpu.vector_store %arg15[%c0_9, %c0_10, %c0_11], %17 {strides = array<i32>} : memref<1x4x16xf32, #tpu.memory_space<vmem>>, vector<1x4x16xf32>,
    %cst_12 = arith.constant 0.000000e+00 : f32
    %18 = vector.broadcast %cst_12 : f32 to vector<1x8xf32>
    %c0_13 = arith.constant 0 : index
    %c0_14 = arith.constant 0 : index
    %19 = vector.load %arg17[%c0_13, %c0_14] : memref<34x8xf32, #tpu.memory_space<vmem>>, vector<1x8xf32>
    tpu.vector_store %arg17[%c0_13, %c0_14], %18 {strides = array<i32>} : memref<34x8xf32, #tpu.memory_space<vmem>>, vector<1x8xf32>,
    %20 = tpu.transpose %1, [1, 0] : vector<8x32xf32> -> vector<32x8xf32>
    %c1 = arith.constant 1 : index
    %c0_15 = arith.constant 0 : index
    %21 = vector.load %arg17[%c1, %c0_15] : memref<34x8xf32, #tpu.memory_space<vmem>>, vector<32x8xf32>
    tpu.vector_store %arg17[%c1, %c0_15], %20 {strides = array<i32>} : memref<34x8xf32, #tpu.memory_space<vmem>>, vector<32x8xf32>,
    %cst_16 = arith.constant 0.000000e+00 : f32
    %22 = vector.broadcast %cst_16 : f32 to vector<1x8xf32>
    %c33 = arith.constant 33 : index
    %c0_17 = arith.constant 0 : index
    %23 = vector.load %arg17[%c33, %c0_17] : memref<34x8xf32, #tpu.memory_space<vmem>>, vector<1x8xf32>
    tpu.vector_store %arg17[%c33, %c0_17], %22 {strides = array<i32>} : memref<34x8xf32, #tpu.memory_space<vmem>>, vector<1x8xf32>,
    %c0_18 = arith.constant 0 : index
    %c0_19 = arith.constant 0 : index
    %24 = vector.load %arg6[%c0_18, %c0_19] : memref<1x8xf32, #tpu.memory_space<vmem>>, vector<1x8xf32>
    %c0_20 = arith.constant 0 : index
    %c0_21 = arith.constant 0 : index
    %25 = vector.load %arg17[%c0_20, %c0_21] : memref<34x8xf32, #tpu.memory_space<vmem>>, vector<32x8xf32>
    %26 = arith.truncf %25 : vector<32x8xf32> to vector<32x8xbf16>
    %c0_22 = arith.constant 0 : index
    %c0_23 = arith.constant 0 : index
    %c0_24 = arith.constant 0 : index
    %27 = vector.load %arg5[%c0_22, %c0_23, %c0_24] : memref<3x8x8xf32, #tpu.memory_space<vmem>>, vector<1x8x8xf32>
    %28 = vector.shape_cast %27 : vector<1x8x8xf32> to vector<8x8xf32>
    %29 = arith.truncf %28 : vector<8x8xf32> to vector<8x8xbf16>
    %cst_25 = arith.constant dense<0.000000e+00> : vector<32x8xf32>
    %30 = tpu.matmul %26, %29, %cst_25 {dimension_numbers = #tpu.dot_dimension_numbers<[1], [0], [0], [1], [0, 0, 1, 1], [], []>} : vector<32x8xbf16>, vector<8x8xbf16>, vector<32x8xf32> -> vector<32x8xf32>
    %c1_26 = arith.constant 1 : index
    %c0_27 = arith.constant 0 : index
    %31 = vector.load %arg17[%c1_26, %c0_27] : memref<34x8xf32, #tpu.memory_space<vmem>>, vector<32x8xf32>
    %32 = arith.truncf %31 : vector<32x8xf32> to vector<32x8xbf16>
    %c1_28 = arith.constant 1 : index
    %c0_29 = arith.constant 0 : index
    %c0_30 = arith.constant 0 : index
    %33 = vector.load %arg5[%c1_28, %c0_29, %c0_30] : memref<3x8x8xf32, #tpu.memory_space<vmem>>, vector<1x8x8xf32>
    %34 = vector.shape_cast %33 : vector<1x8x8xf32> to vector<8x8xf32>
    %35 = arith.truncf %34 : vector<8x8xf32> to vector<8x8xbf16>
    %cst_31 = arith.constant dense<0.000000e+00> : vector<32x8xf32>
    %36 = tpu.matmul %32, %35, %cst_31 {dimension_numbers = #tpu.dot_dimension_numbers<[1], [0], [0], [1], [0, 0, 1, 1], [], []>} : vector<32x8xbf16>, vector<8x8xbf16>, vector<32x8xf32> -> vector<32x8xf32>
    %37 = arith.addf %30, %36 : vector<32x8xf32>
    %c2 = arith.constant 2 : index
    %c0_32 = arith.constant 0 : index
    %38 = vector.load %arg17[%c2, %c0_32] : memref<34x8xf32, #tpu.memory_space<vmem>>, vector<32x8xf32>
    %39 = arith.truncf %38 : vector<32x8xf32> to vector<32x8xbf16>
    %c2_33 = arith.constant 2 : index
    %c0_34 = arith.constant 0 : index
    %c0_35 = arith.constant 0 : index
    %40 = vector.load %arg5[%c2_33, %c0_34, %c0_35] : memref<3x8x8xf32, #tpu.memory_space<vmem>>, vector<1x8x8xf32>
    %41 = vector.shape_cast %40 : vector<1x8x8xf32> to vector<8x8xf32>
    %42 = arith.truncf %41 : vector<8x8xf32> to vector<8x8xbf16>
    %cst_36 = arith.constant dense<0.000000e+00> : vector<32x8xf32>
    %43 = tpu.matmul %39, %42, %cst_36 {dimension_numbers = #tpu.dot_dimension_numbers<[1], [0], [0], [1], [0, 0, 1, 1], [], []>} : vector<32x8xbf16>, vector<8x8xbf16>, vector<32x8xf32> -> vector<32x8xf32>
    %44 = arith.addf %37, %43 : vector<32x8xf32>
    %45 = vector.broadcast %24 : vector<1x8xf32> to vector<32x8xf32>
    %46 = arith.addf %44, %45 : vector<32x8xf32>
    %cst_37 = arith.constant 0.000000e+00 : f32
    %47 = vector.broadcast %cst_37 : f32 to vector<32x8xf32>
    %48 = arith.maximumf %46, %47 : vector<32x8xf32>
    %c1_38 = arith.constant 1 : index
    %c0_39 = arith.constant 0 : index
    %49 = vector.load %arg17[%c1_38, %c0_39] : memref<34x8xf32, #tpu.memory_space<vmem>>, vector<32x8xf32>
    tpu.vector_store %arg17[%c1_38, %c0_39], %48 {strides = array<i32>} : memref<34x8xf32, #tpu.memory_space<vmem>>, vector<32x8xf32>,
    %c1_40 = arith.constant 1 : index
    %c0_41 = arith.constant 0 : index
    %50 = tpu.strided_load %arg17[%c1_40, %c0_41] {strides = array<i32: 2, 1>} : memref<34x8xf32, #tpu.memory_space<vmem>>, vector<16x8xf32>
    %c2_42 = arith.constant 2 : index
    %c0_43 = arith.constant 0 : index
    %51 = tpu.strided_load %arg17[%c2_42, %c0_43] {strides = array<i32: 2, 1>} : memref<34x8xf32, #tpu.memory_space<vmem>>, vector<16x8xf32>
    %52 = arith.maximumf %50, %51 : vector<16x8xf32>
    %c1_44 = arith.constant 1 : index
    %c0_45 = arith.constant 0 : index
    %53 = vector.load %arg17[%c1_44, %c0_45] : memref<34x8xf32, #tpu.memory_space<vmem>>, vector<16x8xf32>
    tpu.vector_store %arg17[%c1_44, %c0_45], %52 {strides = array<i32>} : memref<34x8xf32, #tpu.memory_space<vmem>>, vector<16x8xf32>,
    %cst_46 = arith.constant 0.000000e+00 : f32
    %54 = vector.broadcast %cst_46 : f32 to vector<1x8xf32>
    %c17 = arith.constant 17 : index
    %c0_47 = arith.constant 0 : index
    %55 = vector.load %arg17[%c17, %c0_47] : memref<34x8xf32, #tpu.memory_space<vmem>>, vector<1x8xf32>
    tpu.vector_store %arg17[%c17, %c0_47], %54 {strides = array<i32>} : memref<34x8xf32, #tpu.memory_space<vmem>>, vector<1x8xf32>,
    %c0_48 = arith.constant 0 : index
    %c0_49 = arith.constant 0 : index
    %56 = vector.load %arg8[%c0_48, %c0_49] : memref<1x8xf32, #tpu.memory_space<vmem>>, vector<1x8xf32>
    %c0_50 = arith.constant 0 : index
    %c0_51 = arith.constant 0 : index
    %57 = vector.load %arg17[%c0_50, %c0_51] : memref<34x8xf32, #tpu.memory_space<vmem>>, vector<16x8xf32>
    %58 = arith.truncf %57 : vector<16x8xf32> to vector<16x8xbf16>
    %c0_52 = arith.constant 0 : index
    %c0_53 = arith.constant 0 : index
    %c0_54 = arith.constant 0 : index
    %59 = vector.load %arg7[%c0_52, %c0_53, %c0_54] : memref<3x8x8xf32, #tpu.memory_space<vmem>>, vector<1x8x8xf32>
    %60 = vector.shape_cast %59 : vector<1x8x8xf32> to vector<8x8xf32>
    %61 = arith.truncf %60 : vector<8x8xf32> to vector<8x8xbf16>
    %cst_55 = arith.constant dense<0.000000e+00> : vector<16x8xf32>
    %62 = tpu.matmul %58, %61, %cst_55 {dimension_numbers = #tpu.dot_dimension_numbers<[1], [0], [0], [1], [0, 0, 1, 1], [], []>} : vector<16x8xbf16>, vector<8x8xbf16>, vector<16x8xf32> -> vector<16x8xf32>
    %c1_56 = arith.constant 1 : index
    %c0_57 = arith.constant 0 : index
    %63 = vector.load %arg17[%c1_56, %c0_57] : memref<34x8xf32, #tpu.memory_space<vmem>>, vector<16x8xf32>
    %64 = arith.truncf %63 : vector<16x8xf32> to vector<16x8xbf16>
    %c1_58 = arith.constant 1 : index
    %c0_59 = arith.constant 0 : index
    %c0_60 = arith.constant 0 : index
    %65 = vector.load %arg7[%c1_58, %c0_59, %c0_60] : memref<3x8x8xf32, #tpu.memory_space<vmem>>, vector<1x8x8xf32>
    %66 = vector.shape_cast %65 : vector<1x8x8xf32> to vector<8x8xf32>
    %67 = arith.truncf %66 : vector<8x8xf32> to vector<8x8xbf16>
    %cst_61 = arith.constant dense<0.000000e+00> : vector<16x8xf32>
    %68 = tpu.matmul %64, %67, %cst_61 {dimension_numbers = #tpu.dot_dimension_numbers<[1], [0], [0], [1], [0, 0, 1, 1], [], []>} : vector<16x8xbf16>, vector<8x8xbf16>, vector<16x8xf32> -> vector<16x8xf32>
    %69 = arith.addf %62, %68 : vector<16x8xf32>
    %c2_62 = arith.constant 2 : index
    %c0_63 = arith.constant 0 : index
    %70 = vector.load %arg17[%c2_62, %c0_63] : memref<34x8xf32, #tpu.memory_space<vmem>>, vector<16x8xf32>
    %71 = arith.truncf %70 : vector<16x8xf32> to vector<16x8xbf16>
    %c2_64 = arith.constant 2 : index
    %c0_65 = arith.constant 0 : index
    %c0_66 = arith.constant 0 : index
    %72 = vector.load %arg7[%c2_64, %c0_65, %c0_66] : memref<3x8x8xf32, #tpu.memory_space<vmem>>, vector<1x8x8xf32>
    %73 = vector.shape_cast %72 : vector<1x8x8xf32> to vector<8x8xf32>
    %74 = arith.truncf %73 : vector<8x8xf32> to vector<8x8xbf16>
    %cst_67 = arith.constant dense<0.000000e+00> : vector<16x8xf32>
    %75 = tpu.matmul %71, %74, %cst_67 {dimension_numbers = #tpu.dot_dimension_numbers<[1], [0], [0], [1], [0, 0, 1, 1], [], []>} : vector<16x8xbf16>, vector<8x8xbf16>, vector<16x8xf32> -> vector<16x8xf32>
    %76 = arith.addf %69, %75 : vector<16x8xf32>
    %77 = vector.broadcast %56 : vector<1x8xf32> to vector<16x8xf32>
    %78 = arith.addf %76, %77 : vector<16x8xf32>
    %cst_68 = arith.constant 0.000000e+00 : f32
    %79 = vector.broadcast %cst_68 : f32 to vector<16x8xf32>
    %80 = arith.maximumf %78, %79 : vector<16x8xf32>
    %c1_69 = arith.constant 1 : index
    %c0_70 = arith.constant 0 : index
    %81 = vector.load %arg17[%c1_69, %c0_70] : memref<34x8xf32, #tpu.memory_space<vmem>>, vector<16x8xf32>
    tpu.vector_store %arg17[%c1_69, %c0_70], %80 {strides = array<i32>} : memref<34x8xf32, #tpu.memory_space<vmem>>, vector<16x8xf32>,
    %c1_71 = arith.constant 1 : index
    %c0_72 = arith.constant 0 : index
    %82 = tpu.strided_load %arg17[%c1_71, %c0_72] {strides = array<i32: 2, 1>} : memref<34x8xf32, #tpu.memory_space<vmem>>, vector<8x8xf32>
    %c2_73 = arith.constant 2 : index
    %c0_74 = arith.constant 0 : index
    %83 = tpu.strided_load %arg17[%c2_73, %c0_74] {strides = array<i32: 2, 1>} : memref<34x8xf32, #tpu.memory_space<vmem>>, vector<8x8xf32>
    %84 = arith.maximumf %82, %83 : vector<8x8xf32>
    %c0_75 = arith.constant 0 : index
    %c0_76 = arith.constant 0 : index
    %85 = vector.load %arg10[%c0_75, %c0_76] : memref<1x16xf32, #tpu.memory_space<vmem>>, vector<1x16xf32>
    %86 = vector.extract_strided_slice %84 {offsets = [0, 0], sizes = [1, 8], strides = [1, 1]} : vector<8x8xf32> to vector<1x8xf32>
    %c0_77 = arith.constant 0 : index
    %c0_78 = arith.constant 0 : index
    %c0_79 = arith.constant 0 : index
    %87 = vector.load %arg9[%c0_77, %c0_78, %c0_79] : memref<8x8x16xf32, #tpu.memory_space<vmem>>, vector<1x8x16xf32>
    %88 = vector.shape_cast %87 : vector<1x8x16xf32> to vector<8x16xf32>
    %cst_80 = arith.constant dense<0.000000e+00> : vector<1x16xf32>
    %89 = tpu.matmul %86, %88, %cst_80 {dimension_numbers = #tpu.dot_dimension_numbers<[1], [0], [0], [1], [0, 0, 1, 1], [], []>} : vector<1x8xf32>, vector<8x16xf32>, vector<1x16xf32> -> vector<1x16xf32>
    %90 = vector.extract_strided_slice %84 {offsets = [1, 0], sizes = [1, 8], strides = [1, 1]} : vector<8x8xf32> to vector<1x8xf32>
    %c1_81 = arith.constant 1 : index
    %c0_82 = arith.constant 0 : index
    %c0_83 = arith.constant 0 : index
    %91 = vector.load %arg9[%c1_81, %c0_82, %c0_83] : memref<8x8x16xf32, #tpu.memory_space<vmem>>, vector<1x8x16xf32>
    %92 = vector.shape_cast %91 : vector<1x8x16xf32> to vector<8x16xf32>
    %cst_84 = arith.constant dense<0.000000e+00> : vector<1x16xf32>
    %93 = tpu.matmul %90, %92, %cst_84 {dimension_numbers = #tpu.dot_dimension_numbers<[1], [0], [0], [1], [0, 0, 1, 1], [], []>} : vector<1x8xf32>, vector<8x16xf32>, vector<1x16xf32> -> vector<1x16xf32>
    %94 = arith.addf %89, %93 : vector<1x16xf32>
    %95 = vector.extract_strided_slice %84 {offsets = [2, 0], sizes = [1, 8], strides = [1, 1]} : vector<8x8xf32> to vector<1x8xf32>
    %c2_85 = arith.constant 2 : index
    %c0_86 = arith.constant 0 : index
    %c0_87 = arith.constant 0 : index
    %96 = vector.load %arg9[%c2_85, %c0_86, %c0_87] : memref<8x8x16xf32, #tpu.memory_space<vmem>>, vector<1x8x16xf32>
    %97 = vector.shape_cast %96 : vector<1x8x16xf32> to vector<8x16xf32>
    %cst_88 = arith.constant dense<0.000000e+00> : vector<1x16xf32>
    %98 = tpu.matmul %95, %97, %cst_88 {dimension_numbers = #tpu.dot_dimension_numbers<[1], [0], [0], [1], [0, 0, 1, 1], [], []>} : vector<1x8xf32>, vector<8x16xf32>, vector<1x16xf32> -> vector<1x16xf32>
    %99 = arith.addf %94, %98 : vector<1x16xf32>
    %100 = vector.extract_strided_slice %84 {offsets = [3, 0], sizes = [1, 8], strides = [1, 1]} : vector<8x8xf32> to vector<1x8xf32>
    %c3 = arith.constant 3 : index
    %c0_89 = arith.constant 0 : index
    %c0_90 = arith.constant 0 : index
    %101 = vector.load %arg9[%c3, %c0_89, %c0_90] : memref<8x8x16xf32, #tpu.memory_space<vmem>>, vector<1x8x16xf32>
    %102 = vector.shape_cast %101 : vector<1x8x16xf32> to vector<8x16xf32>
    %cst_91 = arith.constant dense<0.000000e+00> : vector<1x16xf32>
    %103 = tpu.matmul %100, %102, %cst_91 {dimension_numbers = #tpu.dot_dimension_numbers<[1], [0], [0], [1], [0, 0, 1, 1], [], []>} : vector<1x8xf32>, vector<8x16xf32>, vector<1x16xf32> -> vector<1x16xf32>
    %104 = arith.addf %99, %103 : vector<1x16xf32>
    %105 = vector.extract_strided_slice %84 {offsets = [4, 0], sizes = [1, 8], strides = [1, 1]} : vector<8x8xf32> to vector<1x8xf32>
    %c4 = arith.constant 4 : index
    %c0_92 = arith.constant 0 : index
    %c0_93 = arith.constant 0 : index
    %106 = vector.load %arg9[%c4, %c0_92, %c0_93] : memref<8x8x16xf32, #tpu.memory_space<vmem>>, vector<1x8x16xf32>
    %107 = vector.shape_cast %106 : vector<1x8x16xf32> to vector<8x16xf32>
    %cst_94 = arith.constant dense<0.000000e+00> : vector<1x16xf32>
    %108 = tpu.matmul %105, %107, %cst_94 {dimension_numbers = #tpu.dot_dimension_numbers<[1], [0], [0], [1], [0, 0, 1, 1], [], []>} : vector<1x8xf32>, vector<8x16xf32>, vector<1x16xf32> -> vector<1x16xf32>
    %109 = arith.addf %104, %108 : vector<1x16xf32>
    %110 = vector.extract_strided_slice %84 {offsets = [5, 0], sizes = [1, 8], strides = [1, 1]} : vector<8x8xf32> to vector<1x8xf32>
    %c5 = arith.constant 5 : index
    %c0_95 = arith.constant 0 : index
    %c0_96 = arith.constant 0 : index
    %111 = vector.load %arg9[%c5, %c0_95, %c0_96] : memref<8x8x16xf32, #tpu.memory_space<vmem>>, vector<1x8x16xf32>
    %112 = vector.shape_cast %111 : vector<1x8x16xf32> to vector<8x16xf32>
    %cst_97 = arith.constant dense<0.000000e+00> : vector<1x16xf32>
    %113 = tpu.matmul %110, %112, %cst_97 {dimension_numbers = #tpu.dot_dimension_numbers<[1], [0], [0], [1], [0, 0, 1, 1], [], []>} : vector<1x8xf32>, vector<8x16xf32>, vector<1x16xf32> -> vector<1x16xf32>
    %114 = arith.addf %109, %113 : vector<1x16xf32>
    %115 = vector.extract_strided_slice %84 {offsets = [6, 0], sizes = [1, 8], strides = [1, 1]} : vector<8x8xf32> to vector<1x8xf32>
    %c6 = arith.constant 6 : index
    %c0_98 = arith.constant 0 : index
    %c0_99 = arith.constant 0 : index
    %116 = vector.load %arg9[%c6, %c0_98, %c0_99] : memref<8x8x16xf32, #tpu.memory_space<vmem>>, vector<1x8x16xf32>
    %117 = vector.shape_cast %116 : vector<1x8x16xf32> to vector<8x16xf32>
    %cst_100 = arith.constant dense<0.000000e+00> : vector<1x16xf32>
    %118 = tpu.matmul %115, %117, %cst_100 {dimension_numbers = #tpu.dot_dimension_numbers<[1], [0], [0], [1], [0, 0, 1, 1], [], []>} : vector<1x8xf32>, vector<8x16xf32>, vector<1x16xf32> -> vector<1x16xf32>
    %119 = arith.addf %114, %118 : vector<1x16xf32>
    %120 = vector.extract_strided_slice %84 {offsets = [7, 0], sizes = [1, 8], strides = [1, 1]} : vector<8x8xf32> to vector<1x8xf32>
    %c7 = arith.constant 7 : index
    %c0_101 = arith.constant 0 : index
    %c0_102 = arith.constant 0 : index
    %121 = vector.load %arg9[%c7, %c0_101, %c0_102] : memref<8x8x16xf32, #tpu.memory_space<vmem>>, vector<1x8x16xf32>
    %122 = vector.shape_cast %121 : vector<1x8x16xf32> to vector<8x16xf32>
    %cst_103 = arith.constant dense<0.000000e+00> : vector<1x16xf32>
    %123 = tpu.matmul %120, %122, %cst_103 {dimension_numbers = #tpu.dot_dimension_numbers<[1], [0], [0], [1], [0, 0, 1, 1], [], []>} : vector<1x8xf32>, vector<8x16xf32>, vector<1x16xf32> -> vector<1x16xf32>
    %124 = arith.addf %119, %123 : vector<1x16xf32>
    %125 = arith.addf %124, %85 : vector<1x16xf32>
    %cst_104 = arith.constant 0.000000e+00 : f32
    %126 = vector.broadcast %cst_104 : f32 to vector<1x16xf32>
    %127 = arith.maximumf %125, %126 : vector<1x16xf32>
    %c0_105 = arith.constant 0 : index
    %c0_106 = arith.constant 0 : index
    %128 = vector.load %arg11[%c0_105, %c0_106] : memref<16x16xf32, #tpu.memory_space<vmem>>, vector<16x16xf32>
    %c0_107 = arith.constant 0 : index
    %c0_108 = arith.constant 0 : index
    %129 = vector.load %arg12[%c0_107, %c0_108] : memref<1x16xf32, #tpu.memory_space<vmem>>, vector<1x16xf32>
    %cst_109 = arith.constant dense<0.000000e+00> : vector<1x16xf32>
    %130 = tpu.matmul %127, %128, %cst_109 {dimension_numbers = #tpu.dot_dimension_numbers<[1], [0], [0], [1], [0, 0, 1, 1], [], []>} : vector<1x16xf32>, vector<16x16xf32>, vector<1x16xf32> -> vector<1x16xf32>
    %131 = arith.addf %130, %129 : vector<1x16xf32>
    %cst_110 = arith.constant 0.000000e+00 : f32
    %132 = vector.broadcast %cst_110 : f32 to vector<1x16xf32>
    %133 = arith.maximumf %131, %132 : vector<1x16xf32>
    %c0_111 = arith.constant 0 : index
    %c0_112 = arith.constant 0 : index
    %134 = vector.load %arg13[%c0_111, %c0_112] : memref<16x4xf32, #tpu.memory_space<vmem>>, vector<16x4xf32>
    %cst_113 = arith.constant dense<0.000000e+00> : vector<1x4xf32>
    %135 = tpu.matmul %133, %134, %cst_113 {dimension_numbers = #tpu.dot_dimension_numbers<[1], [0], [0], [1], [0, 0, 1, 1], [], []>} : vector<1x16xf32>, vector<16x4xf32>, vector<1x4xf32> -> vector<1x4xf32>
    %c0_114 = arith.constant 0 : index
    %c0_115 = arith.constant 0 : index
    %136 = vector.load %arg14[%c0_114, %c0_115] : memref<1x4xf32, #tpu.memory_space<vmem>>, vector<1x4xf32>
    %137 = arith.addf %135, %136 : vector<1x4xf32>
    %138 = math.absf %3 : vector<1x32xf32>
    %cst_116 = arith.constant dense<0.000000e+00> : vector<1xf32>
    %139 = vector.multi_reduction <add>, %138, %cst_116 [1] : vector<1x32xf32> to vector<1xf32>
    %140 = vector.shape_cast %139 : vector<1xf32> to vector<1x1xf32>
    %cst_117 = arith.constant 1.000000e+00 : f32
    %141 = vector.broadcast %cst_117 : f32 to vector<1x1xf32>
    %142 = arith.addf %141, %140 : vector<1x1xf32>
    %143 = math.log %142 : vector<1x1xf32>
    %144 = vector.broadcast %143 : vector<1x1xf32> to vector<1x4xf32>
    %145 = arith.addf %137, %144 : vector<1x4xf32>
    %c0_118 = arith.constant 0 : index
    %c0_119 = arith.constant 0 : index
    %c0_120 = arith.constant 0 : index
    %146 = vector.load %arg16[%c0_118, %c0_119, %c0_120] : memref<1x1x4xf32, #tpu.memory_space<vmem>>, vector<1x1x4xf32>
    %147 = vector.shape_cast %146 : vector<1x1x4xf32> to vector<1x4xf32>
    %148 = vector.shape_cast %145 : vector<1x4xf32> to vector<1x1x4xf32>
    tpu.vector_store %arg16[%c0_118, %c0_119, %c0_120], %148 {strides = array<i32>} : memref<1x1x4xf32, #tpu.memory_space<vmem>>, vector<1x1x4xf32>,
    return
  }
  func.func @transform_0(%arg0: i32) -> (i32, i32, i32) {
    %c0_i32 = arith.constant 0 : i32
    %c0_i32_0 = arith.constant 0 : i32
    %c0_i32_1 = arith.constant 0 : i32
    return %arg0, %c0_i32, %c0_i32_0 : i32, i32, i32
  }
  func.func @transform_1(%arg0: i32) -> (i32, i32, i32) {
    %c0_i32 = arith.constant 0 : i32
    %c0_i32_0 = arith.constant 0 : i32
    %c0_i32_1 = arith.constant 0 : i32
    return %arg0, %c0_i32, %c0_i32_0 : i32, i32, i32
  }
  func.func @transform_2(%arg0: i32) -> (i32, i32) {
    %c0_i32 = arith.constant 0 : i32
    %c0_i32_0 = arith.constant 0 : i32
    %c0_i32_1 = arith.constant 0 : i32
    return %c0_i32, %c0_i32_0 : i32, i32
  }
  func.func @transform_3(%arg0: i32) -> (i32, i32) {
    %c0_i32 = arith.constant 0 : i32
    %c0_i32_0 = arith.constant 0 : i32
    %c0_i32_1 = arith.constant 0 : i32
    return %c0_i32, %c0_i32_0 : i32, i32
  }
  func.func @transform_4(%arg0: i32) -> (i32, i32, i32) {
    %c0_i32 = arith.constant 0 : i32
    %c0_i32_0 = arith.constant 0 : i32
    %c0_i32_1 = arith.constant 0 : i32
    %c0_i32_2 = arith.constant 0 : i32
    return %c0_i32, %c0_i32_0, %c0_i32_1 : i32, i32, i32
  }
  func.func @transform_5(%arg0: i32) -> (i32, i32) {
    %c0_i32 = arith.constant 0 : i32
    %c0_i32_0 = arith.constant 0 : i32
    %c0_i32_1 = arith.constant 0 : i32
    return %c0_i32, %c0_i32_0 : i32, i32
  }
  func.func @transform_6(%arg0: i32) -> (i32, i32, i32) {
    %c0_i32 = arith.constant 0 : i32
    %c0_i32_0 = arith.constant 0 : i32
    %c0_i32_1 = arith.constant 0 : i32
    %c0_i32_2 = arith.constant 0 : i32
    return %c0_i32, %c0_i32_0, %c0_i32_1 : i32, i32, i32
  }
  func.func @transform_7(%arg0: i32) -> (i32, i32) {
    %c0_i32 = arith.constant 0 : i32
    %c0_i32_0 = arith.constant 0 : i32
    %c0_i32_1 = arith.constant 0 : i32
    return %c0_i32, %c0_i32_0 : i32, i32
  }
  func.func @transform_8(%arg0: i32) -> (i32, i32, i32) {
    %c0_i32 = arith.constant 0 : i32
    %c0_i32_0 = arith.constant 0 : i32
    %c0_i32_1 = arith.constant 0 : i32
    %c0_i32_2 = arith.constant 0 : i32
    return %c0_i32, %c0_i32_0, %c0_i32_1 : i32, i32, i32
  }
  func.func @transform_9(%arg0: i32) -> (i32, i32) {
    %c0_i32 = arith.constant 0 : i32
    %c0_i32_0 = arith.constant 0 : i32
    %c0_i32_1 = arith.constant 0 : i32
    return %c0_i32, %c0_i32_0 : i32, i32
  }
  func.func @transform_10(%arg0: i32) -> (i32, i32) {
    %c0_i32 = arith.constant 0 : i32
    %c0_i32_0 = arith.constant 0 : i32
    %c0_i32_1 = arith.constant 0 : i32
    return %c0_i32, %c0_i32_0 : i32, i32
  }
  func.func @transform_11(%arg0: i32) -> (i32, i32) {
    %c0_i32 = arith.constant 0 : i32
    %c0_i32_0 = arith.constant 0 : i32
    %c0_i32_1 = arith.constant 0 : i32
    return %c0_i32, %c0_i32_0 : i32, i32
  }
  func.func @transform_12(%arg0: i32) -> (i32, i32) {
    %c0_i32 = arith.constant 0 : i32
    %c0_i32_0 = arith.constant 0 : i32
    %c0_i32_1 = arith.constant 0 : i32
    return %c0_i32, %c0_i32_0 : i32, i32
  }
  func.func @transform_13(%arg0: i32) -> (i32, i32) {
    %c0_i32 = arith.constant 0 : i32
    %c0_i32_0 = arith.constant 0 : i32
    %c0_i32_1 = arith.constant 0 : i32
    return %c0_i32, %c0_i32_0 : i32, i32
  }
  func.func @transform_14(%arg0: i32) -> (i32, i32, i32) {
    %c0_i32 = arith.constant 0 : i32
    %c0_i32_0 = arith.constant 0 : i32
    %c0_i32_1 = arith.constant 0 : i32
    return %arg0, %c0_i32, %c0_i32_0 : i32, i32, i32
  }
  func.func @transform_15(%arg0: i32) -> (i32, i32, i32) {
    %c0_i32 = arith.constant 0 : i32
    %c0_i32_0 = arith.constant 0 : i32
    %c0_i32_1 = arith.constant 0 : i32
    return %arg0, %c0_i32, %c0_i32_0 : i32, i32, i32
  }
}

</mosaic_0001>

<llo_original>
// kernel: tpu_custom_call.1
$region0: #{tpu_custom_call.1}
  #allocation0 [shape = 'u32[]', space=smem, size = 0x4, offset = 0x4, fixed_abs, tag = 'smem constant byte address 0x4 - core index']
  #allocation1 [shape = 'u32[144,128]{1,0:T(1,128)}', space=vmem, size = 0x12000, scoped, tag = 'internal scratch']
  #allocation2 [shape = 'f32[34,8]{1,0:T(8,128)}', space=vmem, size = 0x5000, scoped, tag = 'scratch operand']
  %s0 = inlined_call_operand.vmem [shape: f32[2,8,32], index: 0, kind: input, shape index: {}]
  %s1 = inlined_call_operand.hbm [shape: f32[2,1,32], index: 1, kind: input, shape index: {}]
  %s2 = inlined_call_operand.hbm [shape: f32[4,8], index: 2, kind: input, shape index: {}]
  %s3 = inlined_call_operand.vmem [shape: f32[4,1], index: 3, kind: input, shape index: {}]
  %s4 = inlined_call_operand.vmem [shape: f32[3,8,8], index: 4, kind: input, shape index: {}]
  %s5 = inlined_call_operand.vmem [shape: f32[1,8], index: 5, kind: input, shape index: {}]
  %s6 = inlined_call_operand.hbm [shape: f32[3,8,8], index: 6, kind: input, shape index: {}]
  %s7 = inlined_call_operand.vmem [shape: f32[1,8], index: 7, kind: input, shape index: {}]
  %s8 = inlined_call_operand.hbm [shape: f32[8,8,16], index: 8, kind: input, shape index: {}]
  %s9 = inlined_call_operand.hbm [shape: f32[1,16], index: 9, kind: input, shape index: {}]
  %s10 = inlined_call_operand.vmem [shape: f32[16,16], index: 10, kind: input, shape index: {}]
  %s11 = inlined_call_operand.vmem [shape: f32[1,16], index: 11, kind: input, shape index: {}]
  %s12 = inlined_call_operand.vmem [shape: f32[16,4], index: 12, kind: input, shape index: {}]
  %s13 = inlined_call_operand.vmem [shape: f32[1,4], index: 13, kind: input, shape index: {}]
  %s14 = inlined_call_operand.hbm [shape: f32[2,4,16], index: 14, kind: output, shape index: {0}]
  %s15 = inlined_call_operand.hbm [shape: f32[2,1,4], index: 15, kind: output, shape index: {1}]
  %16 = xla_tuple %s14, %s15
  %s17 = sld [smem:[#allocation0]]
  $region117: #{tpu_custom_call.1} parent=0
    _
  %s19 = ssub.s32 1, %s17
  %s20 = scalar_select 0, %s19, %s17
  $region1: #{tpu_custom_call.1} parent=0
    #allocation3 [shape = 'u8[1024]{0}', space=vmem, size = 0x400, scoped, tag = 'input window, operand 1']
    #allocation4 [shape = 's32[2]{0}', space=sflag, size = 0x8, scoped, tag = 'scoped memory for tpu_custom_call.1']
    #allocation5 [shape = 's32[2]{0}', space=sflag, size = 0x8, scoped, tag = 'scoped memory for tpu_custom_call.1']
    #allocation6 [shape = 'u8[2048]{0}', space=vmem, size = 0x800, scoped, tag = 'input window, operand 2, single buffered']
    #allocation7 [shape = 's32[1]{0}', space=sflag, size = 0x4, scoped, tag = 'scoped memory for tpu_custom_call.1']
    #allocation8 [shape = 'u8[12288]{0}', space=vmem, size = 0x3000, scoped, tag = 'input window, operand 6, single buffered']
    #allocation9 [shape = 'u8[32768]{0}', space=vmem, size = 0x8000, scoped, tag = 'input window, operand 8, single buffered']
    #allocation10 [shape = 's32[1]{0}', space=sflag, size = 0x4, scoped, tag = 'scoped memory for tpu_custom_call.1']
    #allocation11 [shape = 'u8[512]{0}', space=vmem, size = 0x400, scoped, tag = 'input window, operand 9, single buffered']
    #allocation12 [shape = 'u8[4096]{0}', space=vmem, size = 0x1000, scoped, tag = 'output window, operand 0']
    #allocation13 [shape = 'u8[1024]{0}', space=vmem, size = 0x400, scoped, tag = 'output window, operand 1']
    #allocation14 [shape = 's32[2]{0}', space=sflag, size = 0x8, scoped, tag = 'scoped memory for tpu_custom_call.1']
    %21 = vsyncpa [#allocation4], 0
    %s22 = scalar_lea.sflag [#allocation4], 1
    %23 = vsyncpa %s22, 0
    %24 = vsyncpa [#allocation7], 0
    %25 = vsyncpa [#allocation10], 0
    %26 = vsyncpa [#allocation5], 0
    %s27 = scalar_lea.sflag [#allocation5], 1
    %28 = vsyncpa %s27, 0
    %29 = vsyncpa [#allocation14], 0
    %s30 = scalar_lea.sflag [#allocation14], 1
    %31 = vsyncpa %s30, 0
    loop: start=0, step=1, limit=4
    $region2: #{tpu_custom_call.1} parent=1 // loop_pre_header
      _
    $region3: #{tpu_custom_call.1} parent=1 // loop_header
      %s33 = sphi 0, %s37
      %p34 = scmp.ge.s32.totalorder %s33, 4
      %s43 = sphi 0, %s45
      %s46 = sphi 0, %s43
      %s47 = sphi 0, %s46
      %s63 = sphi 0, %s47
      %s69 = sphi 0, %s71
      %s72 = sphi 0, %s69
      %s73 = sphi 0, %s72
      %s89 = sphi 0, %s73
      %s93 = sphi 0, %s93
      %s95 = sphi 0, %s93
      %s96 = sphi 0, %s95
      %s110 = sphi 0, %s96
      %s114 = sphi 0, %s114
      %s116 = sphi 0, %s114
      %s117 = sphi 0, %s116
      %s131 = sphi 0, %s117
      %s135 = sphi 0, %s135
      %s137 = sphi 0, %s135
      %s138 = sphi 0, %s137
      %s152 = sphi 0, %s138
      %s156 = sphi 0, %s156
      %s158 = sphi 0, %s156
      %s159 = sphi 0, %s158
      %s173 = sphi 0, %s159
      %s177 = sphi 0, %s177
      %s179 = sphi 0, %s177
      %s180 = sphi 0, %s179
      %s194 = sphi 0, %s180
      %s198 = sphi 0, %s198
      %s200 = sphi 0, %s198
      %s201 = sphi 0, %s200
      %s215 = sphi 0, %s201
      %s219 = sphi 0, %s219
      %s221 = sphi 0, %s219
      %s222 = sphi 0, %s221
      %s236 = sphi 0, %s222
      %s240 = sphi 0, %s240
      %s242 = sphi 0, %s240
      %s243 = sphi 0, %s242
      %s257 = sphi 0, %s243
      %s261 = sphi 0, %s261
      %s263 = sphi 0, %s261
      %s264 = sphi 0, %s263
      %s278 = sphi 0, %s264
      %s282 = sphi 0, %s282
      %s284 = sphi 0, %s282
      %s285 = sphi 0, %s284
      %s299 = sphi 0, %s285
      %s303 = sphi 0, %s303
      %s305 = sphi 0, %s303
      %s306 = sphi 0, %s305
      %s320 = sphi 0, %s306
      %s324 = sphi 0, %s324
      %s326 = sphi 0, %s324
      %s327 = sphi 0, %s326
      %s341 = sphi 0, %s327
      %s347 = sphi 0, %s349
      %s350 = sphi 0, %s347
      %s351 = sphi 0, %s350
      %s367 = sphi 0, %s351
      %s373 = sphi 0, %s375
      %s376 = sphi 0, %s373
      %s377 = sphi 0, %s376
      %s393 = sphi 0, %s377
    $region4: #{tpu_custom_call.1} parent=1 // loop_header_branch
      %36 = sbr.rel (%p34) target = $region8
    $region5: #{tpu_custom_call.1} parent=1 // loop_body
      %s38 = ssub.s32 %s33, 1
      %s39 = ssub.s32 %s33, 2
      %s40 = sadd.s32 %s33, 1
      %s41 = ssub.s32 %s33, %s40
      %p42 = scmp.eq.s32.totalorder %s41, 0
      %s44 = sadd.s32 %s43, 1
      %s45 = scalar_select %p42, %s43, %s44
      %p48 = pneg %p42
      %p49 = scmp.eq.s32.totalorder %s33, 1
      %p50 = por %p48, %p49
      %p51 = scmp.ne.s32.totalorder %s43, %s46
      %p52 = scmp.eq.s32.totalorder %s33, 0
      %p53 = por %p51, %p52
      %p54 = scmp.ne.s32.totalorder %s43, %s46
      %p55 = scmp.eq.s32.totalorder %s38, 1
      %p56 = por %p54, %p55
      %p57 = scmp.ne.s32.totalorder %s46, %s47
      %p58 = scmp.eq.s32.totalorder %s38, 0
      %p59 = por %p57, %p58
      %p60 = scmp.ne.s32.totalorder %s46, %s47
      %p61 = scmp.eq.s32.totalorder %s39, 1
      %p62 = por %p60, %p61
      %p64 = scmp.ne.s32.totalorder %s47, %s63
      %p65 = scmp.eq.s32.totalorder %s39, 0
      %p66 = por %p64, %p65
      %s67 = ssub.s32 %s33, %s40
      %p68 = scmp.eq.s32.totalorder %s67, 0
      %s70 = sadd.s32 %s69, 1
      %s71 = scalar_select %p68, %s69, %s70
      %p74 = pneg %p68
      %p75 = scmp.eq.s32.totalorder %s33, 1
      %p76 = por %p74, %p75
      %p77 = scmp.ne.s32.totalorder %s69, %s72
      %p78 = scmp.eq.s32.totalorder %s33, 0
      %p79 = por %p77, %p78
      %p80 = scmp.ne.s32.totalorder %s69, %s72
      %p81 = scmp.eq.s32.totalorder %s38, 1
      %p82 = por %p80, %p81
      %p83 = scmp.ne.s32.totalorder %s72, %s73
      %p84 = scmp.eq.s32.totalorder %s38, 0
      %p85 = por %p83, %p84
      %p86 = scmp.ne.s32.totalorder %s72, %s73
      %p87 = scmp.eq.s32.totalorder %s39, 1
      %p88 = por %p86, %p87
      %p90 = scmp.ne.s32.totalorder %s73, %s89
      %p91 = scmp.eq.s32.totalorder %s39, 0
      %p92 = por %p90, %p91
      %s94 = sadd.s32 %s93, 1
      %p97 = scmp.eq.s32.totalorder %s33, 1
      %p98 = scmp.ne.s32.totalorder %s93, %s95
      %p99 = scmp.eq.s32.totalorder %s33, 0
      %p100 = por %p98, %p99
      %p101 = scmp.ne.s32.totalorder %s93, %s95
      %p102 = scmp.eq.s32.totalorder %s38, 1
      %p103 = por %p101, %p102
      %p104 = scmp.ne.s32.totalorder %s95, %s96
      %p105 = scmp.eq.s32.totalorder %s38, 0
      %p106 = por %p104, %p105
      %p107 = scmp.ne.s32.totalorder %s95, %s96
      %p108 = scmp.eq.s32.totalorder %s39, 1
      %p109 = por %p107, %p108
      %p111 = scmp.ne.s32.totalorder %s96, %s110
      %p112 = scmp.eq.s32.totalorder %s39, 0
      %p113 = por %p111, %p112
      %s115 = sadd.s32 %s114, 1
      %p118 = scmp.eq.s32.totalorder %s33, 1
      %p119 = scmp.ne.s32.totalorder %s114, %s116
      %p120 = scmp.eq.s32.totalorder %s33, 0
      %p121 = por %p119, %p120
      %p122 = scmp.ne.s32.totalorder %s114, %s116
      %p123 = scmp.eq.s32.totalorder %s38, 1
      %p124 = por %p122, %p123
      %p125 = scmp.ne.s32.totalorder %s116, %s117
      %p126 = scmp.eq.s32.totalorder %s38, 0
      %p127 = por %p125, %p126
      %p128 = scmp.ne.s32.totalorder %s116, %s117
      %p129 = scmp.eq.s32.totalorder %s39, 1
      %p130 = por %p128, %p129
      %p132 = scmp.ne.s32.totalorder %s117, %s131
      %p133 = scmp.eq.s32.totalorder %s39, 0
      %p134 = por %p132, %p133
      %s136 = sadd.s32 %s135, 1
      %p139 = scmp.eq.s32.totalorder %s33, 1
      %p140 = scmp.ne.s32.totalorder %s135, %s137
      %p141 = scmp.eq.s32.totalorder %s33, 0
      %p142 = por %p140, %p141
      %p143 = scmp.ne.s32.totalorder %s135, %s137
      %p144 = scmp.eq.s32.totalorder %s38, 1
      %p145 = por %p143, %p144
      %p146 = scmp.ne.s32.totalorder %s137, %s138
      %p147 = scmp.eq.s32.totalorder %s38, 0
      %p148 = por %p146, %p147
      %p149 = scmp.ne.s32.totalorder %s137, %s138
      %p150 = scmp.eq.s32.totalorder %s39, 1
      %p151 = por %p149, %p150
      %p153 = scmp.ne.s32.totalorder %s138, %s152
      %p154 = scmp.eq.s32.totalorder %s39, 0
      %p155 = por %p153, %p154
      %s157 = sadd.s32 %s156, 1
      %p160 = scmp.eq.s32.totalorder %s33, 1
      %p161 = scmp.ne.s32.totalorder %s156, %s158
      %p162 = scmp.eq.s32.totalorder %s33, 0
      %p163 = por %p161, %p162
      %p164 = scmp.ne.s32.totalorder %s156, %s158
      %p165 = scmp.eq.s32.totalorder %s38, 1
      %p166 = por %p164, %p165
      %p167 = scmp.ne.s32.totalorder %s158, %s159
      %p168 = scmp.eq.s32.totalorder %s38, 0
      %p169 = por %p167, %p168
      %p170 = scmp.ne.s32.totalorder %s158, %s159
      %p171 = scmp.eq.s32.totalorder %s39, 1
      %p172 = por %p170, %p171
      %p174 = scmp.ne.s32.totalorder %s159, %s173
      %p175 = scmp.eq.s32.totalorder %s39, 0
      %p176 = por %p174, %p175
      %s178 = sadd.s32 %s177, 1
      %p181 = scmp.eq.s32.totalorder %s33, 1
      %p182 = scmp.ne.s32.totalorder %s177, %s179
      %p183 = scmp.eq.s32.totalorder %s33, 0
      %p184 = por %p182, %p183
      %p185 = scmp.ne.s32.totalorder %s177, %s179
      %p186 = scmp.eq.s32.totalorder %s38, 1
      %p187 = por %p185, %p186
      %p188 = scmp.ne.s32.totalorder %s179, %s180
      %p189 = scmp.eq.s32.totalorder %s38, 0
      %p190 = por %p188, %p189
      %p191 = scmp.ne.s32.totalorder %s179, %s180
      %p192 = scmp.eq.s32.totalorder %s39, 1
      %p193 = por %p191, %p192
      %p195 = scmp.ne.s32.totalorder %s180, %s194
      %p196 = scmp.eq.s32.totalorder %s39, 0
      %p197 = por %p195, %p196
      %s199 = sadd.s32 %s198, 1
      %p202 = scmp.eq.s32.totalorder %s33, 1
      %p203 = scmp.ne.s32.totalorder %s198, %s200
      %p204 = scmp.eq.s32.totalorder %s33, 0
      %p205 = por %p203, %p204
      %p206 = scmp.ne.s32.totalorder %s198, %s200
      %p207 = scmp.eq.s32.totalorder %s38, 1
      %p208 = por %p206, %p207
      %p209 = scmp.ne.s32.totalorder %s200, %s201
      %p210 = scmp.eq.s32.totalorder %s38, 0
      %p211 = por %p209, %p210
      %p212 = scmp.ne.s32.totalorder %s200, %s201
      %p213 = scmp.eq.s32.totalorder %s39, 1
      %p214 = por %p212, %p213
      %p216 = scmp.ne.s32.totalorder %s201, %s215
      %p217 = scmp.eq.s32.totalorder %s39, 0
      %p218 = por %p216, %p217
      %s220 = sadd.s32 %s219, 1
      %p223 = scmp.eq.s32.totalorder %s33, 1
      %p224 = scmp.ne.s32.totalorder %s219, %s221
      %p225 = scmp.eq.s32.totalorder %s33, 0
      %p226 = por %p224, %p225
      %p227 = scmp.ne.s32.totalorder %s219, %s221
      %p228 = scmp.eq.s32.totalorder %s38, 1
      %p229 = por %p227, %p228
      %p230 = scmp.ne.s32.totalorder %s221, %s222
      %p231 = scmp.eq.s32.totalorder %s38, 0
      %p232 = por %p230, %p231
      %p233 = scmp.ne.s32.totalorder %s221, %s222
      %p234 = scmp.eq.s32.totalorder %s39, 1
      %p235 = por %p233, %p234
      %p237 = scmp.ne.s32.totalorder %s222, %s236
      %p238 = scmp.eq.s32.totalorder %s39, 0
      %p239 = por %p237, %p238
      %s241 = sadd.s32 %s240, 1
      %p244 = scmp.eq.s32.totalorder %s33, 1
      %p245 = scmp.ne.s32.totalorder %s240, %s242
      %p246 = scmp.eq.s32.totalorder %s33, 0
      %p247 = por %p245, %p246
      %p248 = scmp.ne.s32.totalorder %s240, %s242
      %p249 = scmp.eq.s32.totalorder %s38, 1
      %p250 = por %p248, %p249
      %p251 = scmp.ne.s32.totalorder %s242, %s243
      %p252 = scmp.eq.s32.totalorder %s38, 0
      %p253 = por %p251, %p252
      %p254 = scmp.ne.s32.totalorder %s242, %s243
      %p255 = scmp.eq.s32.totalorder %s39, 1
      %p256 = por %p254, %p255
      %p258 = scmp.ne.s32.totalorder %s243, %s257
      %p259 = scmp.eq.s32.totalorder %s39, 0
      %p260 = por %p258, %p259
      %s262 = sadd.s32 %s261, 1
      %p265 = scmp.eq.s32.totalorder %s33, 1
      %p266 = scmp.ne.s32.totalorder %s261, %s263
      %p267 = scmp.eq.s32.totalorder %s33, 0
      %p268 = por %p266, %p267
      %p269 = scmp.ne.s32.totalorder %s261, %s263
      %p270 = scmp.eq.s32.totalorder %s38, 1
      %p271 = por %p269, %p270
      %p272 = scmp.ne.s32.totalorder %s263, %s264
      %p273 = scmp.eq.s32.totalorder %s38, 0
      %p274 = por %p272, %p273
      %p275 = scmp.ne.s32.totalorder %s263, %s264
      %p276 = scmp.eq.s32.totalorder %s39, 1
      %p277 = por %p275, %p276
      %p279 = scmp.ne.s32.totalorder %s264, %s278
      %p280 = scmp.eq.s32.totalorder %s39, 0
      %p281 = por %p279, %p280
      %s283 = sadd.s32 %s282, 1
      %p286 = scmp.eq.s32.totalorder %s33, 1
      %p287 = scmp.ne.s32.totalorder %s282, %s284
      %p288 = scmp.eq.s32.totalorder %s33, 0
      %p289 = por %p287, %p288
      %p290 = scmp.ne.s32.totalorder %s282, %s284
      %p291 = scmp.eq.s32.totalorder %s38, 1
      %p292 = por %p290, %p291
      %p293 = scmp.ne.s32.totalorder %s284, %s285
      %p294 = scmp.eq.s32.totalorder %s38, 0
      %p295 = por %p293, %p294
      %p296 = scmp.ne.s32.totalorder %s284, %s285
      %p297 = scmp.eq.s32.totalorder %s39, 1
      %p298 = por %p296, %p297
      %p300 = scmp.ne.s32.totalorder %s285, %s299
      %p301 = scmp.eq.s32.totalorder %s39, 0
      %p302 = por %p300, %p301
      %s304 = sadd.s32 %s303, 1
      %p307 = scmp.eq.s32.totalorder %s33, 1
      %p308 = scmp.ne.s32.totalorder %s303, %s305
      %p309 = scmp.eq.s32.totalorder %s33, 0
      %p310 = por %p308, %p309
      %p311 = scmp.ne.s32.totalorder %s303, %s305
      %p312 = scmp.eq.s32.totalorder %s38, 1
      %p313 = por %p311, %p312
      %p314 = scmp.ne.s32.totalorder %s305, %s306
      %p315 = scmp.eq.s32.totalorder %s38, 0
      %p316 = por %p314, %p315
      %p317 = scmp.ne.s32.totalorder %s305, %s306
      %p318 = scmp.eq.s32.totalorder %s39, 1
      %p319 = por %p317, %p318
      %p321 = scmp.ne.s32.totalorder %s306, %s320
      %p322 = scmp.eq.s32.totalorder %s39, 0
      %p323 = por %p321, %p322
      %s325 = sadd.s32 %s324, 1
      %p328 = scmp.eq.s32.totalorder %s33, 1
      %p329 = scmp.ne.s32.totalorder %s324, %s326
      %p330 = scmp.eq.s32.totalorder %s33, 0
      %p331 = por %p329, %p330
      %p332 = scmp.ne.s32.totalorder %s324, %s326
      %p333 = scmp.eq.s32.totalorder %s38, 1
      %p334 = por %p332, %p333
      %p335 = scmp.ne.s32.totalorder %s326, %s327
      %p336 = scmp.eq.s32.totalorder %s38, 0
      %p337 = por %p335, %p336
      %p338 = scmp.ne.s32.totalorder %s326, %s327
      %p339 = scmp.eq.s32.totalorder %s39, 1
      %p340 = por %p338, %p339
      %p342 = scmp.ne.s32.totalorder %s327, %s341
      %p343 = scmp.eq.s32.totalorder %s39, 0
      %p344 = por %p342, %p343
      %s345 = ssub.s32 %s33, %s40
      %p346 = scmp.eq.s32.totalorder %s345, 0
      %s348 = sadd.s32 %s347, 1
      %s349 = scalar_select %p346, %s347, %s348
      %p352 = pneg %p346
      %p353 = scmp.eq.s32.totalorder %s33, 1
      %p354 = por %p352, %p353
      %p355 = scmp.ne.s32.totalorder %s347, %s350
      %p356 = scmp.eq.s32.totalorder %s33, 0
      %p357 = por %p355, %p356
      %p358 = scmp.ne.s32.totalorder %s347, %s350
      %p359 = scmp.eq.s32.totalorder %s38, 1
      %p360 = por %p358, %p359
      %p361 = scmp.ne.s32.totalorder %s350, %s351
      %p362 = scmp.eq.s32.totalorder %s38, 0
      %p363 = por %p361, %p362
      %p364 = scmp.ne.s32.totalorder %s350, %s351
      %p365 = scmp.eq.s32.totalorder %s39, 1
      %p366 = por %p364, %p365
      %p368 = scmp.ne.s32.totalorder %s351, %s367
      %p369 = scmp.eq.s32.totalorder %s39, 0
      %p370 = por %p368, %p369
      %s371 = ssub.s32 %s33, %s40
      %p372 = scmp.eq.s32.totalorder %s371, 0
      %s374 = sadd.s32 %s373, 1
      %s375 = scalar_select %p372, %s373, %s374
      %p378 = pneg %p372
      %p379 = scmp.eq.s32.totalorder %s33, 1
      %p380 = por %p378, %p379
      %p381 = scmp.ne.s32.totalorder %s373, %s376
      %p382 = scmp.eq.s32.totalorder %s33, 0
      %p383 = por %p381, %p382
      %p384 = scmp.ne.s32.totalorder %s373, %s376
      %p385 = scmp.eq.s32.totalorder %s38, 1
      %p386 = por %p384, %p385
      %p387 = scmp.ne.s32.totalorder %s376, %s377
      %p388 = scmp.eq.s32.totalorder %s38, 0
      %p389 = por %p387, %p388
      %p390 = scmp.ne.s32.totalorder %s376, %s377
      %p391 = scmp.eq.s32.totalorder %s39, 1
      %p392 = por %p390, %p391
      %p394 = scmp.ne.s32.totalorder %s377, %s393
      %p395 = scmp.eq.s32.totalorder %s39, 0
      %p396 = por %p394, %p395
      %p397 = scmp.le.s32.totalorder 1, %s33
      %p398 = scmp.lt.s32.totalorder %s33, 3
      %p399 = pnand %p397, %p398
      %p400 = pneg %p399
      // Predicated region
      $region9: #{tpu_custom_call.1} parent=5 // pred_check
        _
      $region10: #{tpu_custom_call.1} parent=5 // pred_check_branch
        %402 = sbr.rel (%p399) target = $region12
      $region11: #{tpu_custom_call.1} parent=5 // pred_region
        %s403 = ssub.s32 %s33, 1
        // Predicated region
        $region13: #{tpu_custom_call.1} parent=11 // pred_check
          %p404 = pneg %p106
        $region14: #{tpu_custom_call.1} parent=11 // pred_check_branch
          %406 = sbr.rel (%p404) target = $region16
        $region15: #{tpu_custom_call.1} parent=11 // pred_region
          %s408 = ssub.s32 64, 64
          %409 = vsyncadd [#allocation7], %s408
          %s411 = sshll.u32 [#allocation6], 4
          %s412 = int_to_ptr.vmem [resolvable:$true] %s411
          %414 = dma.hbm_to_vmem [thread:$0]  %s2, 64, %s412, [#allocation7]
        $region16: #{tpu_custom_call.1} parent=11 // pred_fallthru
          _
        // Predicated region
        $region17: #{tpu_custom_call.1} parent=11 // pred_check
          %p415 = pneg %p127
        $region18: #{tpu_custom_call.1} parent=11 // pred_check_branch
          %417 = sbr.rel (%p415) target = $region20
        $region19: #{tpu_custom_call.1} parent=11 // pred_region
          _
        $region20: #{tpu_custom_call.1} parent=11 // pred_fallthru
          _
        // Predicated region
        $region21: #{tpu_custom_call.1} parent=11 // pred_check
          %p418 = pneg %p148
        $region22: #{tpu_custom_call.1} parent=11 // pred_check_branch
          %420 = sbr.rel (%p418) target = $region24
        $region23: #{tpu_custom_call.1} parent=11 // pred_region
          _
        $region24: #{tpu_custom_call.1} parent=11 // pred_fallthru
          _
        // Predicated region
        $region25: #{tpu_custom_call.1} parent=11 // pred_check
          %p421 = pneg %p169
        $region26: #{tpu_custom_call.1} parent=11 // pred_check_branch
          %423 = sbr.rel (%p421) target = $region28
        $region27: #{tpu_custom_call.1} parent=11 // pred_region
          _
        $region28: #{tpu_custom_call.1} parent=11 // pred_fallthru
          _
        // Predicated region
        $region29: #{tpu_custom_call.1} parent=11 // pred_check
          %p424 = pneg %p190
        $region30: #{tpu_custom_call.1} parent=11 // pred_check_branch
          %426 = sbr.rel (%p424) target = $region32
        $region31: #{tpu_custom_call.1} parent=11 // pred_region
          %s428 = ssub.s32 384, 384
          %429 = vsyncadd [#allocation7], %s428
          %s430 = sshll.u32 [#allocation8], 4
          %s431 = int_to_ptr.vmem [resolvable:$true] %s430
          %436 = dma.hbm_to_vmem [thread:$0]  %s6, 384, %s431, [#allocation7], 128, 128, 8
        $region32: #{tpu_custom_call.1} parent=11 // pred_fallthru
          _
        // Predicated region
        $region33: #{tpu_custom_call.1} parent=11 // pred_check
          %p437 = pneg %p211
        $region34: #{tpu_custom_call.1} parent=11 // pred_check_branch
          %439 = sbr.rel (%p437) target = $region36
        $region35: #{tpu_custom_call.1} parent=11 // pred_region
          _
        $region36: #{tpu_custom_call.1} parent=11 // pred_fallthru
          _
        // Predicated region
        $region37: #{tpu_custom_call.1} parent=11 // pred_check
          %p440 = pneg %p232
        $region38: #{tpu_custom_call.1} parent=11 // pred_check_branch
          %442 = sbr.rel (%p440) target = $region40
        $region39: #{tpu_custom_call.1} parent=11 // pred_region
          %s444 = ssub.s32 1024, 1024
          %445 = vsyncadd [#allocation10], %s444
          %s446 = sshll.u32 [#allocation9], 4
          %s447 = int_to_ptr.vmem [resolvable:$true] %s446
          %452 = dma.hbm_to_vmem [thread:$0]  %s8, 1024, %s447, [#allocation10], 128, 128, 8
        $region40: #{tpu_custom_call.1} parent=11 // pred_fallthru
          _
        // Predicated region
        $region41: #{tpu_custom_call.1} parent=11 // pred_check
          %p453 = pneg %p253
        $region42: #{tpu_custom_call.1} parent=11 // pred_check_branch
          %455 = sbr.rel (%p453) target = $region44
        $region43: #{tpu_custom_call.1} parent=11 // pred_region
          %s457 = ssub.s32 16, 16
          %458 = vsyncadd [#allocation10], %s457
          %s460 = sshll.u32 [#allocation11], 4
          %s461 = int_to_ptr.vmem [resolvable:$true] %s460
          %463 = dma.hbm_to_vmem [thread:$0]  %s9, 16, %s461, [#allocation10]
        $region44: #{tpu_custom_call.1} parent=11 // pred_fallthru
          _
        // Predicated region
        $region45: #{tpu_custom_call.1} parent=11 // pred_check
          %p464 = pneg %p274
        $region46: #{tpu_custom_call.1} parent=11 // pred_check_branch
          %466 = sbr.rel (%p464) target = $region48
        $region47: #{tpu_custom_call.1} parent=11 // pred_region
          _
        $region48: #{tpu_custom_call.1} parent=11 // pred_fallthru
          _
        // Predicated region
        $region49: #{tpu_custom_call.1} parent=11 // pred_check
          %p467 = pneg %p295
        $region50: #{tpu_custom_call.1} parent=11 // pred_check_branch
          %469 = sbr.rel (%p467) target = $region52
        $region51: #{tpu_custom_call.1} parent=11 // pred_region
          _
        $region52: #{tpu_custom_call.1} parent=11 // pred_fallthru
          _
        // Predicated region
        $region53: #{tpu_custom_call.1} parent=11 // pred_check
          %p470 = pneg %p316
        $region54: #{tpu_custom_call.1} parent=11 // pred_check_branch
          %472 = sbr.rel (%p470) target = $region56
        $region55: #{tpu_custom_call.1} parent=11 // pred_region
          _
        $region56: #{tpu_custom_call.1} parent=11 // pred_fallthru
          _
        // Predicated region
        $region57: #{tpu_custom_call.1} parent=11 // pred_check
          %p473 = pneg %p337
        $region58: #{tpu_custom_call.1} parent=11 // pred_check_branch
          %475 = sbr.rel (%p473) target = $region60
        $region59: #{tpu_custom_call.1} parent=11 // pred_region
          _
        $region60: #{tpu_custom_call.1} parent=11 // pred_fallthru
          _
      $region12: #{tpu_custom_call.1} parent=5 // pred_fallthru
        _
      %p476 = scmp.lt.s32.totalorder %s33, 2
      // Predicated region
      $region61: #{tpu_custom_call.1} parent=5 // pred_check
        %p477 = pneg %p476
      $region62: #{tpu_custom_call.1} parent=5 // pred_check_branch
        %479 = sbr.rel (%p477) target = $region64
      $region63: #{tpu_custom_call.1} parent=5 // pred_region
        // Predicated region
        $region65: #{tpu_custom_call.1} parent=63 // pred_check
          %p480 = pneg %p53
        $region66: #{tpu_custom_call.1} parent=63 // pred_check_branch
          %482 = sbr.rel (%p480) target = $region68
        $region67: #{tpu_custom_call.1} parent=63 // pred_region
          %p483 = scmp.lt.s32.totalorder %s33, 1
          %s484 = scalar_select %p483, %s33, 1
          %s485 = smul.addr %s484, 8
          %s486 = scalar_lea.vmem %s0, %s485
        $region68: #{tpu_custom_call.1} parent=63 // pred_fallthru
          _
        // Predicated region
        $region69: #{tpu_custom_call.1} parent=63 // pred_check
          %p487 = pneg %p79
        $region70: #{tpu_custom_call.1} parent=63 // pred_check_branch
          %489 = sbr.rel (%p487) target = $region72
        $region71: #{tpu_custom_call.1} parent=63 // pred_region
          %s490 = sand.u32 %s69, 1
          %s491 = scalar_lea.sflag [#allocation4], %s490
          %s492 = sand.u32 %s69, 1
          %s493 = scalar_lea.vmem [#allocation3], %s492
          %s495 = ssub.s32 16, 16
          %496 = vsyncadd %s491, %s495
          %s497 = smul.addr %s33, 16
          %s498 = scalar_lea.hbm %s1, %s497
          %s500 = sshll.u32 %s493, 4
          %s501 = int_to_ptr.vmem [resolvable:$true] %s500
          %503 = dma.hbm_to_vmem [thread:$0]  %s498, 16, %s501, %s491
        $region72: #{tpu_custom_call.1} parent=63 // pred_fallthru
          _
      $region64: #{tpu_custom_call.1} parent=5 // pred_fallthru
        _
      %p504 = scmp.le.s32.totalorder 1, %s33
      %p505 = scmp.lt.s32.totalorder %s33, 3
      %p506 = pnand %p504, %p505
      %p507 = pneg %p506
      // Predicated region
      $region73: #{tpu_custom_call.1} parent=5 // pred_check
        _
      $region74: #{tpu_custom_call.1} parent=5 // pred_check_branch
        %509 = sbr.rel (%p506) target = $region76
      $region75: #{tpu_custom_call.1} parent=5 // pred_region
        %s510 = ssub.s32 %s33, 1
        %s511 = sand.u32 %s72, 1
        %s512 = scalar_lea.sflag [#allocation4], %s511
        %s513 = sand.u32 %s72, 1
        %s514 = scalar_lea.vmem [#allocation3], %s513
        // Predicated region
        $region77: #{tpu_custom_call.1} parent=75 // pred_check
          %p515 = pneg %p85
        $region78: #{tpu_custom_call.1} parent=75 // pred_check_branch
          %517 = sbr.rel (%p515) target = $region80
        $region79: #{tpu_custom_call.1} parent=75 // pred_region
          %518 = dma.done %s512, 16
        $region80: #{tpu_custom_call.1} parent=75 // pred_fallthru
          _
        // Predicated region
        $region81: #{tpu_custom_call.1} parent=75 // pred_check
          %p519 = pneg %p106
        $region82: #{tpu_custom_call.1} parent=75 // pred_check_branch
          %521 = sbr.rel (%p519) target = $region84
        $region83: #{tpu_custom_call.1} parent=75 // pred_region
          %522 = dma.done [#allocation7], 64
        $region84: #{tpu_custom_call.1} parent=75 // pred_fallthru
          _
        // Predicated region
        $region85: #{tpu_custom_call.1} parent=75 // pred_check
          %p523 = pneg %p190
        $region86: #{tpu_custom_call.1} parent=75 // pred_check_branch
          %525 = sbr.rel (%p523) target = $region88
        $region87: #{tpu_custom_call.1} parent=75 // pred_region
          %526 = dma.done [#allocation7], 384
        $region88: #{tpu_custom_call.1} parent=75 // pred_fallthru
          _
        // Predicated region
        $region89: #{tpu_custom_call.1} parent=75 // pred_check
          %p527 = pneg %p232
        $region90: #{tpu_custom_call.1} parent=75 // pred_check_branch
          %529 = sbr.rel (%p527) target = $region92
        $region91: #{tpu_custom_call.1} parent=75 // pred_region
          %530 = dma.done [#allocation10], 1024
        $region92: #{tpu_custom_call.1} parent=75 // pred_fallthru
          _
        // Predicated region
        $region93: #{tpu_custom_call.1} parent=75 // pred_check
          %p531 = pneg %p253
        $region94: #{tpu_custom_call.1} parent=75 // pred_check_branch
          %533 = sbr.rel (%p531) target = $region96
        $region95: #{tpu_custom_call.1} parent=75 // pred_region
          %534 = dma.done [#allocation10], 16
        $region96: #{tpu_custom_call.1} parent=75 // pred_fallthru
          _
        %p535 = scmp.lt.s32.totalorder %s38, 1
        %s536 = scalar_select %p535, %s38, 1
        %s537 = smul.addr %s536, 8
        %s538 = scalar_lea.vmem %s0, %s537
        %p539 = pneg %p59
        %p540 = pneg %p56
        %s541 = sand.u32 %s72, 1
        %s542 = scalar_lea.sflag [#allocation4], %s541
        %s543 = sand.u32 %s72, 1
        %s544 = scalar_lea.vmem [#allocation3], %s543
        %p545 = pneg %p85
        %p546 = pneg %p82
        %p547 = pneg %p106
        %p548 = pneg %p103
        %p549 = pneg %p127
        %p550 = pneg %p124
        %p551 = pneg %p148
        %p552 = pneg %p145
        %p553 = pneg %p169
        %p554 = pneg %p166
        %p555 = pneg %p190
        %p556 = pneg %p187
        %p557 = pneg %p211
        %p558 = pneg %p208
        %p559 = pneg %p232
        %p560 = pneg %p229
        %p561 = pneg %p253
        %p562 = pneg %p250
        %p563 = pneg %p274
        %p564 = pneg %p271
        %p565 = pneg %p295
        %p566 = pneg %p292
        %p567 = pneg %p316
        %p568 = pneg %p313
        %p569 = pneg %p337
        %p570 = pneg %p334
        %p571 = pneg %p363
        %p572 = pneg %p360
        %s573 = sand.u32 %s350, 1
        %s574 = scalar_lea.sflag [#allocation5], %s573
        %s575 = sand.u32 %s350, 1
        %s576 = smul.addr %s575, 4
        %s577 = scalar_lea.vmem [#allocation12], %s576
        %p578 = pneg %p389
        %p579 = pneg %p386
        %s580 = sand.u32 %s376, 1
        %s581 = scalar_lea.sflag [#allocation14], %s580
        %s582 = sand.u32 %s376, 1
        %s583 = scalar_lea.vmem [#allocation13], %s582
        %p584 = scmp.lt.s32.totalorder %s38, 1
        %s585 = scalar_select %p584, %s38, 1
        %s586 = smul.addr %s585, 8
        %s587 = scalar_lea.vmem %s0, %s586
        %v589 = vld [vmem:[%s587] sm:$0xff]
        %v590 = vld [vmem:[%s514] sm:$0x1]
        %v591 = vpack.c.bf16 %v589, %v589
        %v592 = vld [vmem:[#allocation6] sm:$0xf]
        %v593 = vpack.c.bf16 %v592, %v592
        %v594 = vld [vmem:[%s3] sm:$0xf]
        %596 = vset.pattern.permute.xlu0 0
        %597 = vperm.xlu0 %596, %v594
        %v598 = vpop.permute.xlu0 %597
        %601 = vrot.lane.b32.xlu0 %v591, 120
        %v602 = vpop.permute.xlu0 %601
        %vm603 = vcmask 64512
        %v605 = vsel %vm603, %v593, 0
        %vm607 = vcmask 1043456
        %v609 = vsel %vm607, %v602, 0
        %611 = vmatprep.subr.bf16.mxu0 0
        %612 = vmatpush1.bf16.msra.mxu0 %v609
        %613 = vmatprep.subr.bf16.mxu0 0
        %614 = vmatpush1.bf16.msra.mxu0 0
        %615 = vmatprep.subr.bf16.mxu0 0
        %616 = vmatpush1.bf16.msra.mxu0 0
        %617 = vmatprep.subr.bf16.mxu0 0
        %618 = vmatpush1.bf16.msra.mxu0 0
        %619 = vmatprep.subr.bf16.mxu0 0
        %620 = vmatpush1.bf16.msra.mxu0 0
        %621 = vmatprep.subr.bf16.mxu0 0
        %622 = vmatpush1.bf16.msra.mxu0 0
        %623 = vmatprep.subr.bf16.mxu0 0
        %624 = vmatpush1.bf16.msra.mxu0 0
        %625 = vmatprep.subr.bf16.mxu0 0
        %626 = vmatpush1.bf16.msra.mxu0 0
        %627 = vmatprep.subr.bf16.mxu0 0
        %628 = vmatpush1.bf16.msra.mxu0 0
        %629 = vmatprep.subr.bf16.mxu0 0
        %630 = vmatpush1.bf16.msra.mxu0 0
        %631 = vmatprep.subr.bf16.mxu0 0
        %632 = vmatpush1.bf16.msra.mxu0 0
        %633 = vmatprep.subr.bf16.mxu0 0
        %634 = vmatpush1.bf16.msra.mxu0 0
        %635 = vmatprep.subr.bf16.mxu0 0
        %636 = vmatpush1.bf16.msra.mxu0 0
        %637 = vmatprep.subr.bf16.mxu0 0
        %638 = vmatpush1.bf16.msra.mxu0 0
        %639 = vmatprep.subr.bf16.mxu0 0
        %640 = vmatpush1.bf16.msra.mxu0 0
        %641 = vmatprep.subr.bf16.mxu0 0
        %642 = vmatpush1.bf16.msra.mxu0 0
        %643 = vmatprep.mubr.bf16.mxu0 0
        %644 = vmatmul.mubr.bf16.gmra.mrb[0].mxu0 %v605
        %v645 = vpop.f32.mrb[0].mxu0
        %v646 = vadd.f32 %v598, %v645
        %v647 = vpop.f32.mrb[0].mxu0
        %v648 = vpop.f32.mrb[0].mxu0
        %v649 = vpop.f32.mrb[0].mxu0
        %650 = vdwg.mxu0
        %v652 = vlaneseq
        %v653 = vshrl.u32 %v652, 7
        %v654 = vsub.s32 0, %v653
        %v655 = vrot.slane %v590, %v654
        %656 = vrot.lane.b32.xlu0 %v655, 120
        %v657 = vpop.permute.xlu0 %656
        %v659 = vadd.f32 %v646, %v657
        %vm660 = vcmask 125952
        %661 = vst.msk [vmem:[%s577] sm:$0xf] %vm660, %v659
        %vm662 = vcmask 57344
        %663 = vst.msk [vmem:[#allocation2] sm:$0x1] %vm662, 0.0
        %664 = vxpose.xlu0.b32.start [1/16] %v589, 128
        %665 = vxpose.xlu0.b32.cont [2/16] 0.0, 128
        %666 = vxpose.xlu0.b32.cont [3/16] 0.0, 128
        %667 = vxpose.xlu0.b32.cont [4/16] 0.0, 128
        %668 = vxpose.xlu0.b32.cont [5/16] 0.0, 128
        %669 = vxpose.xlu0.b32.cont [6/16] 0.0, 128
        %670 = vxpose.xlu0.b32.cont [7/16] 0.0, 128
        %671 = vxpose.xlu0.b32.cont [8/16] 0.0, 128
        %672 = vxpose.xlu0.b32.cont [9/16] 0.0, 128
        %673 = vxpose.xlu0.b32.cont [10/16] 0.0, 128
        %674 = vxpose.xlu0.b32.cont [11/16] 0.0, 128
        %675 = vxpose.xlu0.b32.cont [12/16] 0.0, 128
        %676 = vxpose.xlu0.b32.cont [13/16] 0.0, 128
        %677 = vxpose.xlu0.b32.cont [14/16] 0.0, 128
        %678 = vxpose.xlu0.b32.cont [15/16] 0.0, 128
        %679 = vxpose.xlu0.b32.end [16/16] 0.0, 128
        %v680 = vpop.trf.xlu0
        %v681 = vpop.trf.xlu0
        %v682 = vpop.trf.xlu0
        %v683 = vpop.trf.xlu0
        %v684 = vpop.trf.xlu0
        %v685 = vpop.trf.xlu0
        %v686 = vpop.trf.xlu0
        %v687 = vpop.trf.xlu0
        %v688 = vpop.trf.xlu0
        %v689 = vpop.trf.xlu0
        %v690 = vpop.trf.xlu0
        %v691 = vpop.trf.xlu0
        %v692 = vpop.trf.xlu0
        %v693 = vpop.trf.xlu0
        %v694 = vpop.trf.xlu0
        %v695 = vpop.trf.xlu0
        %696 = vst.msk [vmem:[#allocation2 + $0x1] sm:$0xff] %vm603, %v680
        %697 = vst.msk [vmem:[#allocation2 + $0x9] sm:$0xff] %vm603, %v681
        %698 = vst.msk [vmem:[#allocation2 + $0x11] sm:$0xff] %vm603, %v682
        %699 = vst.msk [vmem:[#allocation2 + $0x19] sm:$0xff] %vm603, %v683
        %700 = vst.msk [vmem:[#allocation2 + $0x21] sm:$0x1] %vm662, 0.0
        %v701 = vld [vmem:[%s5] sm:$0x1]
        %v702 = vld [vmem:[#allocation2] sm:$0xff]
        %v703 = vld [vmem:[#allocation2 + $0x8] sm:$0xff]
        %v704 = vld [vmem:[#allocation2 + $0x10] sm:$0xff]
        %v705 = vld [vmem:[#allocation2 + $0x18] sm:$0xff]
        %v706 = vpack.c.bf16 %v703, %v702
        %v707 = vpack.c.bf16 %v705, %v704
        %v708 = vld [vmem:[%s4] sm:$0xff]
        %v709 = vpack.c.bf16 %v708, %v708
        %v710 = vld [vmem:[#allocation2 + $0x1] sm:$0xff]
        %v711 = vld [vmem:[#allocation2 + $0x9] sm:$0xff]
        %v712 = vld [vmem:[#allocation2 + $0x11] sm:$0xff]
        %v713 = vld [vmem:[#allocation2 + $0x19] sm:$0xff]
        %v714 = vpack.c.bf16 %v711, %v710
        %v715 = vpack.c.bf16 %v713, %v712
        %s716 = scalar_lea.vmem %s4, 8
        %v717 = vld [vmem:[%s716] sm:$0xff]
        %v718 = vpack.c.bf16 %v717, %v717
        %v720 = vsel %vm603, %v714, 0
        %v723 = vsel %vm603, %v715, 0
        %v726 = vsel %vm607, %v718, 0
        %728 = vmatprep.subr.bf16.mxu0 0
        %729 = vmatpush1.bf16.msra.mxu0 %v726
        %730 = vmatprep.subr.bf16.mxu0 0
        %731 = vmatpush1.bf16.msra.mxu0 0
        %732 = vmatprep.subr.bf16.mxu0 0
        %733 = vmatpush1.bf16.msra.mxu0 0
        %734 = vmatprep.subr.bf16.mxu0 0
        %735 = vmatpush1.bf16.msra.mxu0 0
        %736 = vmatprep.subr.bf16.mxu0 0
        %737 = vmatpush1.bf16.msra.mxu0 0
        %738 = vmatprep.subr.bf16.mxu0 0
        %739 = vmatpush1.bf16.msra.mxu0 0
        %740 = vmatprep.subr.bf16.mxu0 0
        %741 = vmatpush1.bf16.msra.mxu0 0
        %742 = vmatprep.subr.bf16.mxu0 0
        %743 = vmatpush1.bf16.msra.mxu0 0
        %744 = vmatprep.subr.bf16.mxu0 0
        %745 = vmatpush1.bf16.msra.mxu0 0
        %746 = vmatprep.subr.bf16.mxu0 0
        %747 = vmatpush1.bf16.msra.mxu0 0
        %748 = vmatprep.subr.bf16.mxu0 0
        %749 = vmatpush1.bf16.msra.mxu0 0
        %750 = vmatprep.subr.bf16.mxu0 0
        %751 = vmatpush1.bf16.msra.mxu0 0
        %752 = vmatprep.subr.bf16.mxu0 0
        %753 = vmatpush1.bf16.msra.mxu0 0
        %754 = vmatprep.subr.bf16.mxu0 0
        %755 = vmatpush1.bf16.msra.mxu0 0
        %756 = vmatprep.subr.bf16.mxu0 0
        %757 = vmatpush1.bf16.msra.mxu0 0
        %758 = vmatprep.subr.bf16.mxu0 0
        %759 = vmatpush1.bf16.msra.mxu0 0
        %760 = vmatprep.mubr.bf16.mxu0 0
        %761 = vmatmul.mubr.bf16.gmra.mrb[0].mxu0 %v720
        %v762 = vpop.f32.mrb[0].mxu0
        %v763 = vadd.f32 0.0, %v762
        %v764 = vpop.f32.mrb[0].mxu0
        %v765 = vpop.f32.mrb[0].mxu0
        %v766 = vadd.f32 0.0, %v765
        %v767 = vpop.f32.mrb[0].mxu0
        %768 = vmatprep.mubr.bf16.mxu0 0
        %769 = vmatmul.mubr.bf16.gmra.mrb[0].mxu0 %v723
        %v770 = vpop.f32.mrb[0].mxu0
        %v771 = vadd.f32 0.0, %v770
        %v772 = vpop.f32.mrb[0].mxu0
        %v773 = vpop.f32.mrb[0].mxu0
        %v774 = vadd.f32 0.0, %v773
        %v775 = vpop.f32.mrb[0].mxu0
        %776 = vdwg.mxu0
        %v778 = vsel %vm603, %v706, 0
        %v781 = vsel %vm603, %v707, 0
        %v784 = vsel %vm607, %v709, 0
        %786 = vmatprep.subr.bf16.mxu0 0
        %787 = vmatpush1.bf16.msra.mxu0 %v784
        %788 = vmatprep.subr.bf16.mxu0 0
        %789 = vmatpush1.bf16.msra.mxu0 0
        %790 = vmatprep.subr.bf16.mxu0 0
        %791 = vmatpush1.bf16.msra.mxu0 0
        %792 = vmatprep.subr.bf16.mxu0 0
        %793 = vmatpush1.bf16.msra.mxu0 0
        %794 = vmatprep.subr.bf16.mxu0 0
        %795 = vmatpush1.bf16.msra.mxu0 0
        %796 = vmatprep.subr.bf16.mxu0 0
        %797 = vmatpush1.bf16.msra.mxu0 0
        %798 = vmatprep.subr.bf16.mxu0 0
        %799 = vmatpush1.bf16.msra.mxu0 0
        %800 = vmatprep.subr.bf16.mxu0 0
        %801 = vmatpush1.bf16.msra.mxu0 0
        %802 = vmatprep.subr.bf16.mxu0 0
        %803 = vmatpush1.bf16.msra.mxu0 0
        %804 = vmatprep.subr.bf16.mxu0 0
        %805 = vmatpush1.bf16.msra.mxu0 0
        %806 = vmatprep.subr.bf16.mxu0 0
        %807 = vmatpush1.bf16.msra.mxu0 0
        %808 = vmatprep.subr.bf16.mxu0 0
        %809 = vmatpush1.bf16.msra.mxu0 0
        %810 = vmatprep.subr.bf16.mxu0 0
        %811 = vmatpush1.bf16.msra.mxu0 0
        %812 = vmatprep.subr.bf16.mxu0 0
        %813 = vmatpush1.bf16.msra.mxu0 0
        %814 = vmatprep.subr.bf16.mxu0 0
        %815 = vmatpush1.bf16.msra.mxu0 0
        %816 = vmatprep.subr.bf16.mxu0 0
        %817 = vmatpush1.bf16.msra.mxu0 0
        %818 = vmatprep.mubr.bf16.mxu0 0
        %819 = vmatmul.mubr.bf16.gmra.mrb[0].mxu0 %v778
        %v820 = vpop.f32.mrb[0].mxu0
        %v821 = vadd.f32 %v763, %v820
        %v822 = vpop.f32.mrb[0].mxu0
        %v823 = vpop.f32.mrb[0].mxu0
        %v824 = vadd.f32 %v766, %v823
        %v825 = vpop.f32.mrb[0].mxu0
        %826 = vmatprep.mubr.bf16.mxu0 0
        %827 = vmatmul.mubr.bf16.gmra.mrb[0].mxu0 %v781
        %v828 = vpop.f32.mrb[0].mxu0
        %v829 = vadd.f32 %v771, %v828
        %v830 = vpop.f32.mrb[0].mxu0
        %v831 = vpop.f32.mrb[0].mxu0
        %v832 = vadd.f32 %v774, %v831
        %v833 = vpop.f32.mrb[0].mxu0
        %834 = vdwg.mxu0
        %v835 = vld [vmem:[#allocation2 + $0x2] sm:$0xff]
        %v836 = vld [vmem:[#allocation2 + $0xa] sm:$0xff]
        %v837 = vld [vmem:[#allocation2 + $0x12] sm:$0xff]
        %v838 = vld [vmem:[#allocation2 + $0x1a] sm:$0xff]
        %v839 = vpack.c.bf16 %v836, %v835
        %v840 = vpack.c.bf16 %v838, %v837
        %s841 = scalar_lea.vmem %s4, 16
        %v842 = vld [vmem:[%s841] sm:$0xff]
        %v843 = vpack.c.bf16 %v842, %v842
        %v845 = vsel %vm603, %v839, 0
        %v848 = vsel %vm603, %v840, 0
        %v851 = vsel %vm607, %v843, 0
        %853 = vmatprep.subr.bf16.mxu0 0
        %854 = vmatpush1.bf16.msra.mxu0 %v851
        %855 = vmatprep.subr.bf16.mxu0 0
        %856 = vmatpush1.bf16.msra.mxu0 0
        %857 = vmatprep.subr.bf16.mxu0 0
        %858 = vmatpush1.bf16.msra.mxu0 0
        %859 = vmatprep.subr.bf16.mxu0 0
        %860 = vmatpush1.bf16.msra.mxu0 0
        %861 = vmatprep.subr.bf16.mxu0 0
        %862 = vmatpush1.bf16.msra.mxu0 0
        %863 = vmatprep.subr.bf16.mxu0 0
        %864 = vmatpush1.bf16.msra.mxu0 0
        %865 = vmatprep.subr.bf16.mxu0 0
        %866 = vmatpush1.bf16.msra.mxu0 0
        %867 = vmatprep.subr.bf16.mxu0 0
        %868 = vmatpush1.bf16.msra.mxu0 0
        %869 = vmatprep.subr.bf16.mxu0 0
        %870 = vmatpush1.bf16.msra.mxu0 0
        %871 = vmatprep.subr.bf16.mxu0 0
        %872 = vmatpush1.bf16.msra.mxu0 0
        %873 = vmatprep.subr.bf16.mxu0 0
        %874 = vmatpush1.bf16.msra.mxu0 0
        %875 = vmatprep.subr.bf16.mxu0 0
        %876 = vmatpush1.bf16.msra.mxu0 0
        %877 = vmatprep.subr.bf16.mxu0 0
        %878 = vmatpush1.bf16.msra.mxu0 0
        %879 = vmatprep.subr.bf16.mxu0 0
        %880 = vmatpush1.bf16.msra.mxu0 0
        %881 = vmatprep.subr.bf16.mxu0 0
        %882 = vmatpush1.bf16.msra.mxu0 0
        %883 = vmatprep.subr.bf16.mxu0 0
        %884 = vmatpush1.bf16.msra.mxu0 0
        %885 = vmatprep.mubr.bf16.mxu0 0
        %886 = vmatmul.mubr.bf16.gmra.mrb[0].mxu0 %v845
        %v887 = vpop.f32.mrb[0].mxu0
        %v888 = vadd.f32 0.0, %v887
        %v889 = vpop.f32.mrb[0].mxu0
        %v890 = vpop.f32.mrb[0].mxu0
        %v891 = vadd.f32 0.0, %v890
        %v892 = vpop.f32.mrb[0].mxu0
        %893 = vmatprep.mubr.bf16.mxu0 0
        %894 = vmatmul.mubr.bf16.gmra.mrb[0].mxu0 %v848
        %v895 = vpop.f32.mrb[0].mxu0
        %v896 = vadd.f32 0.0, %v895
        %v897 = vpop.f32.mrb[0].mxu0
        %v898 = vpop.f32.mrb[0].mxu0
        %v899 = vadd.f32 0.0, %v898
        %v900 = vpop.f32.mrb[0].mxu0
        %901 = vdwg.mxu0
        %v902 = vadd.f32 %v821, %v888
        %v903 = vadd.f32 %v824, %v891
        %v904 = vadd.f32 %v829, %v896
        %v905 = vadd.f32 %v832, %v899
        %v907 = vlaneseq
        %v908 = vshrl.u32 %v907, 7
        %v909 = vsub.s32 0, %v908
        %v910 = vrot.slane %v701, %v909
        %v912 = vadd.f32 %v902, %v910
        %v913 = vadd.f32 %v903, %v910
        %v914 = vadd.f32 %v904, %v910
        %v915 = vadd.f32 %v905, %v910
        %v916 = vmax.f32 %v912, 0.0
        %v917 = vmax.f32 %v913, 0.0
        %v918 = vmax.f32 %v914, 0.0
        %v919 = vmax.f32 %v915, 0.0
        %920 = vst.msk [vmem:[#allocation2 + $0x1] sm:$0xff] %vm603, %v916
        %921 = vst.msk [vmem:[#allocation2 + $0x9] sm:$0xff] %vm603, %v917
        %922 = vst.msk [vmem:[#allocation2 + $0x11] sm:$0xff] %vm603, %v918
        %923 = vst.msk [vmem:[#allocation2 + $0x19] sm:$0xff] %vm603, %v919
        %s924 = scalar_lea.vmem [#allocation2], 1
        %v925 = vld [vmem:[%s924] ss:$2 sm:$0xff]
        %s926 = scalar_lea.vmem [#allocation2], 17
        %v927 = vld [vmem:[%s926] ss:$2 sm:$0xff]
        %s928 = scalar_lea.vmem [#allocation2], 2
        %v929 = vld [vmem:[%s928] ss:$2 sm:$0xff]
        %s930 = scalar_lea.vmem [#allocation2], 18
        %v931 = vld [vmem:[%s930] ss:$2 sm:$0xff]
        %v932 = vmax.f32 %v925, %v929
        %v933 = vmax.f32 %v927, %v931
        %934 = vst.msk [vmem:[#allocation2 + $0x1] sm:$0xff] %vm603, %v932
        %935 = vst.msk [vmem:[#allocation2 + $0x9] sm:$0xff] %vm603, %v933
        %936 = vst.msk [vmem:[#allocation2 + $0x11] sm:$0x1] %vm662, 0.0
        %v937 = vld [vmem:[%s7] sm:$0x1]
        %v938 = vld [vmem:[#allocation2] sm:$0xff]
        %v939 = vld [vmem:[#allocation2 + $0x8] sm:$0xff]
        %v940 = vpack.c.bf16 %v939, %v938
        %v941 = vld [vmem:[#allocation8] sm:$0xff]
        %v942 = vpack.c.bf16 %v941, %v941
        %v943 = vld [vmem:[#allocation2 + $0x1] sm:$0xff]
        %v944 = vld [vmem:[#allocation2 + $0x9] sm:$0xff]
        %v945 = vpack.c.bf16 %v944, %v943
        %s946 = scalar_lea.vmem [#allocation8], 8
        %v947 = vld [vmem:[%s946] sm:$0xff]
        %v948 = vpack.c.bf16 %v947, %v947
        %v950 = vsel %vm603, %v945, 0
        %v953 = vsel %vm607, %v948, 0
        %955 = vmatprep.subr.bf16.mxu0 0
        %956 = vmatpush1.bf16.msra.mxu0 %v953
        %957 = vmatprep.subr.bf16.mxu0 0
        %958 = vmatpush1.bf16.msra.mxu0 0
        %959 = vmatprep.subr.bf16.mxu0 0
        %960 = vmatpush1.bf16.msra.mxu0 0
        %961 = vmatprep.subr.bf16.mxu0 0
        %962 = vmatpush1.bf16.msra.mxu0 0
        %963 = vmatprep.subr.bf16.mxu0 0
        %964 = vmatpush1.bf16.msra.mxu0 0
        %965 = vmatprep.subr.bf16.mxu0 0
        %966 = vmatpush1.bf16.msra.mxu0 0
        %967 = vmatprep.subr.bf16.mxu0 0
        %968 = vmatpush1.bf16.msra.mxu0 0
        %969 = vmatprep.subr.bf16.mxu0 0
        %970 = vmatpush1.bf16.msra.mxu0 0
        %971 = vmatprep.subr.bf16.mxu0 0
        %972 = vmatpush1.bf16.msra.mxu0 0
        %973 = vmatprep.subr.bf16.mxu0 0
        %974 = vmatpush1.bf16.msra.mxu0 0
        %975 = vmatprep.subr.bf16.mxu0 0
        %976 = vmatpush1.bf16.msra.mxu0 0
        %977 = vmatprep.subr.bf16.mxu0 0
        %978 = vmatpush1.bf16.msra.mxu0 0
        %979 = vmatprep.subr.bf16.mxu0 0
        %980 = vmatpush1.bf16.msra.mxu0 0
        %981 = vmatprep.subr.bf16.mxu0 0
        %982 = vmatpush1.bf16.msra.mxu0 0
        %983 = vmatprep.subr.bf16.mxu0 0
        %984 = vmatpush1.bf16.msra.mxu0 0
        %985 = vmatprep.subr.bf16.mxu0 0
        %986 = vmatpush1.bf16.msra.mxu0 0
        %987 = vmatprep.mubr.bf16.mxu0 0
        %988 = vmatmul.mubr.bf16.gmra.mrb[0].mxu0 %v950
        %v989 = vpop.f32.mrb[0].mxu0
        %v990 = vadd.f32 0.0, %v989
        %v991 = vpop.f32.mrb[0].mxu0
        %v992 = vpop.f32.mrb[0].mxu0
        %v993 = vadd.f32 0.0, %v992
        %v994 = vpop.f32.mrb[0].mxu0
        %995 = vdwg.mxu0
        %v997 = vsel %vm603, %v940, 0
        %v1000 = vsel %vm607, %v942, 0
        %1002 = vmatprep.subr.bf16.mxu0 0
        %1003 = vmatpush1.bf16.msra.mxu0 %v1000
        %1004 = vmatprep.subr.bf16.mxu0 0
        %1005 = vmatpush1.bf16.msra.mxu0 0
        %1006 = vmatprep.subr.bf16.mxu0 0
        %1007 = vmatpush1.bf16.msra.mxu0 0
        %1008 = vmatprep.subr.bf16.mxu0 0
        %1009 = vmatpush1.bf16.msra.mxu0 0
        %1010 = vmatprep.subr.bf16.mxu0 0
        %1011 = vmatpush1.bf16.msra.mxu0 0
        %1012 = vmatprep.subr.bf16.mxu0 0
        %1013 = vmatpush1.bf16.msra.mxu0 0
        %1014 = vmatprep.subr.bf16.mxu0 0
        %1015 = vmatpush1.bf16.msra.mxu0 0
        %1016 = vmatprep.subr.bf16.mxu0 0
        %1017 = vmatpush1.bf16.msra.mxu0 0
        %1018 = vmatprep.subr.bf16.mxu0 0
        %1019 = vmatpush1.bf16.msra.mxu0 0
        %1020 = vmatprep.subr.bf16.mxu0 0
        %1021 = vmatpush1.bf16.msra.mxu0 0
        %1022 = vmatprep.subr.bf16.mxu0 0
        %1023 = vmatpush1.bf16.msra.mxu0 0
        %1024 = vmatprep.subr.bf16.mxu0 0
        %1025 = vmatpush1.bf16.msra.mxu0 0
        %1026 = vmatprep.subr.bf16.mxu0 0
        %1027 = vmatpush1.bf16.msra.mxu0 0
        %1028 = vmatprep.subr.bf16.mxu0 0
        %1029 = vmatpush1.bf16.msra.mxu0 0
        %1030 = vmatprep.subr.bf16.mxu0 0
        %1031 = vmatpush1.bf16.msra.mxu0 0
        %1032 = vmatprep.subr.bf16.mxu0 0
        %1033 = vmatpush1.bf16.msra.mxu0 0
        %1034 = vmatprep.mubr.bf16.mxu0 0
        %1035 = vmatmul.mubr.bf16.gmra.mrb[0].mxu0 %v997
        %v1036 = vpop.f32.mrb[0].mxu0
        %v1037 = vadd.f32 %v990, %v1036
        %v1038 = vpop.f32.mrb[0].mxu0
        %v1039 = vpop.f32.mrb[0].mxu0
        %v1040 = vadd.f32 %v993, %v1039
        %v1041 = vpop.f32.mrb[0].mxu0
        %1042 = vdwg.mxu0
        %v1043 = vld [vmem:[#allocation2 + $0x2] sm:$0xff]
        %v1044 = vld [vmem:[#allocation2 + $0xa] sm:$0xff]
        %v1045 = vpack.c.bf16 %v1044, %v1043
        %s1046 = scalar_lea.vmem [#allocation8], 16
        %v1047 = vld [vmem:[%s1046] sm:$0xff]
        %v1048 = vpack.c.bf16 %v1047, %v1047
        %v1050 = vsel %vm603, %v1045, 0
        %v1053 = vsel %vm607, %v1048, 0
        %1055 = vmatprep.subr.bf16.mxu0 0
        %1056 = vmatpush1.bf16.msra.mxu0 %v1053
        %1057 = vmatprep.subr.bf16.mxu0 0
        %1058 = vmatpush1.bf16.msra.mxu0 0
        %1059 = vmatprep.subr.bf16.mxu0 0
        %1060 = vmatpush1.bf16.msra.mxu0 0
        %1061 = vmatprep.subr.bf16.mxu0 0
        %1062 = vmatpush1.bf16.msra.mxu0 0
        %1063 = vmatprep.subr.bf16.mxu0 0
        %1064 = vmatpush1.bf16.msra.mxu0 0
        %1065 = vmatprep.subr.bf16.mxu0 0
        %1066 = vmatpush1.bf16.msra.mxu0 0
        %1067 = vmatprep.subr.bf16.mxu0 0
        %1068 = vmatpush1.bf16.msra.mxu0 0
        %1069 = vmatprep.subr.bf16.mxu0 0
        %1070 = vmatpush1.bf16.msra.mxu0 0
        %1071 = vmatprep.subr.bf16.mxu0 0
        %1072 = vmatpush1.bf16.msra.mxu0 0
        %1073 = vmatprep.subr.bf16.mxu0 0
        %1074 = vmatpush1.bf16.msra.mxu0 0
        %1075 = vmatprep.subr.bf16.mxu0 0
        %1076 = vmatpush1.bf16.msra.mxu0 0
        %1077 = vmatprep.subr.bf16.mxu0 0
        %1078 = vmatpush1.bf16.msra.mxu0 0
        %1079 = vmatprep.subr.bf16.mxu0 0
        %1080 = vmatpush1.bf16.msra.mxu0 0
        %1081 = vmatprep.subr.bf16.mxu0 0
        %1082 = vmatpush1.bf16.msra.mxu0 0
        %1083 = vmatprep.subr.bf16.mxu0 0
        %1084 = vmatpush1.bf16.msra.mxu0 0
        %1085 = vmatprep.subr.bf16.mxu0 0
        %1086 = vmatpush1.bf16.msra.mxu0 0
        %1087 = vmatprep.mubr.bf16.mxu0 0
        %1088 = vmatmul.mubr.bf16.gmra.mrb[0].mxu0 %v1050
        %v1089 = vpop.f32.mrb[0].mxu0
        %v1090 = vadd.f32 0.0, %v1089
        %v1091 = vpop.f32.mrb[0].mxu0
        %v1092 = vpop.f32.mrb[0].mxu0
        %v1093 = vadd.f32 0.0, %v1092
        %v1094 = vpop.f32.mrb[0].mxu0
        %1095 = vdwg.mxu0
        %v1096 = vadd.f32 %v1037, %v1090
        %v1097 = vadd.f32 %v1040, %v1093
        %v1099 = vlaneseq
        %v1100 = vshrl.u32 %v1099, 7
        %v1101 = vsub.s32 0, %v1100
        %v1102 = vrot.slane %v937, %v1101
        %v1104 = vadd.f32 %v1096, %v1102
        %v1105 = vadd.f32 %v1097, %v1102
        %v1106 = vmax.f32 %v1104, 0.0
        %v1107 = vmax.f32 %v1105, 0.0
        %1108 = vst.msk [vmem:[#allocation2 + $0x1] sm:$0xff] %vm603, %v1106
        %1109 = vst.msk [vmem:[#allocation2 + $0x9] sm:$0xff] %vm603, %v1107
        %v1110 = vld [vmem:[%s924] ss:$2 sm:$0xff]
        %v1111 = vld [vmem:[%s928] ss:$2 sm:$0xff]
        %v1112 = vmax.f32 %v1110, %v1111
        %v1113 = vld [vmem:[#allocation11] sm:$0x1]
        %v1114 = vld [vmem:[#allocation9] sm:$0xff]
        %s1115 = scalar_lea.vmem [#allocation9], 8
        %v1116 = vld [vmem:[%s1115] sm:$0xff]
        %v1118 = vrot.slane %v1112, 1
        %v1119 = vsel %vm603, %v1118, 0
        %1121 = vmatprep.subr.mxu0 0.0
        %1122 = vmatpush1.msra.mxu0 %v1116
        %1123 = vmatprep.subr.mxu0 0.0
        %1124 = vmatpush1.msra.mxu0 0.0
        %1125 = vmatprep.subr.mxu0 0.0
        %1126 = vmatpush1.msra.mxu0 0.0
        %1127 = vmatprep.subr.mxu0 0.0
        %1128 = vmatpush1.msra.mxu0 0.0
        %1129 = vmatprep.subr.mxu0 0.0
        %1130 = vmatpush1.msra.mxu0 0.0
        %1131 = vmatprep.subr.mxu0 0.0
        %1132 = vmatpush1.msra.mxu0 0.0
        %1133 = vmatprep.subr.mxu0 0.0
        %1134 = vmatpush1.msra.mxu0 0.0
        %1135 = vmatprep.subr.mxu0 0.0
        %1136 = vmatpush1.msra.mxu0 0.0
        %1137 = vmatprep.subr.mxu0 0.0
        %1138 = vmatpush1.msra.mxu0 0.0
        %1139 = vmatprep.subr.mxu0 0.0
        %1140 = vmatpush1.msra.mxu0 0.0
        %1141 = vmatprep.subr.mxu0 0.0
        %1142 = vmatpush1.msra.mxu0 0.0
        %1143 = vmatprep.subr.mxu0 0.0
        %1144 = vmatpush1.msra.mxu0 0.0
        %1145 = vmatprep.subr.mxu0 0.0
        %1146 = vmatpush1.msra.mxu0 0.0
        %1147 = vmatprep.subr.mxu0 0.0
        %1148 = vmatpush1.msra.mxu0 0.0
        %1149 = vmatprep.subr.mxu0 0.0
        %1150 = vmatpush1.msra.mxu0 0.0
        %1151 = vmatprep.subr.mxu0 0.0
        %1152 = vmatpush1.msra.mxu0 0.0
        %1153 = vmatprep.subr.mxu0 0.0
        %1154 = vmatpush1.msra.mxu0 0.0
        %1155 = vmatprep.subr.mxu0 0.0
        %1156 = vmatpush1.msra.mxu0 0.0
        %1157 = vmatprep.subr.mxu0 0.0
        %1158 = vmatpush1.msra.mxu0 0.0
        %1159 = vmatprep.subr.mxu0 0.0
        %1160 = vmatpush1.msra.mxu0 0.0
        %1161 = vmatprep.subr.mxu0 0.0
        %1162 = vmatpush1.msra.mxu0 0.0
        %1163 = vmatprep.subr.mxu0 0.0
        %1164 = vmatpush1.msra.mxu0 0.0
        %1165 = vmatprep.subr.mxu0 0.0
        %1166 = vmatpush1.msra.mxu0 0.0
        %1167 = vmatprep.subr.mxu0 0.0
        %1168 = vmatpush1.msra.mxu0 0.0
        %1169 = vmatprep.subr.mxu0 0.0
        %1170 = vmatpush1.msra.mxu0 0.0
        %1171 = vmatprep.subr.mxu0 0.0
        %1172 = vmatpush1.msra.mxu0 0.0
        %1173 = vmatprep.subr.mxu0 0.0
        %1174 = vmatpush1.msra.mxu0 0.0
        %1175 = vmatprep.subr.mxu0 0.0
        %1176 = vmatpush1.msra.mxu0 0.0
        %1177 = vmatprep.subr.mxu0 0.0
        %1178 = vmatpush1.msra.mxu0 0.0
        %1179 = vmatprep.subr.mxu0 0.0
        %1180 = vmatpush1.msra.mxu0 0.0
        %1181 = vmatprep.subr.mxu0 0.0
        %1182 = vmatpush1.msra.mxu0 0.0
        %1183 = vmatprep.subr.mxu0 0.0
        %1184 = vmatpush1.msra.mxu0 0.0
        %1185 = vmatprep.mubr.f32.mxu0 0.0
        %1186 = vmatmul.mubr.f32.gmra.mrb[0].mxu0 %v1119
        %v1187 = vpop.f32.mrb[0].mxu0
        %v1188 = vadd.f32 0.0, %v1187
        %v1189 = vpop.f32.mrb[0].mxu0
        %1190 = vdwg.mxu0
        %v1191 = vsel %vm603, %v1112, 0
        %1193 = vmatprep.subr.mxu0 0.0
        %1194 = vmatpush1.msra.mxu0 %v1114
        %1195 = vmatprep.subr.mxu0 0.0
        %1196 = vmatpush1.msra.mxu0 0.0
        %1197 = vmatprep.subr.mxu0 0.0
        %1198 = vmatpush1.msra.mxu0 0.0
        %1199 = vmatprep.subr.mxu0 0.0
        %1200 = vmatpush1.msra.mxu0 0.0
        %1201 = vmatprep.subr.mxu0 0.0
        %1202 = vmatpush1.msra.mxu0 0.0
        %1203 = vmatprep.subr.mxu0 0.0
        %1204 = vmatpush1.msra.mxu0 0.0
        %1205 = vmatprep.subr.mxu0 0.0
        %1206 = vmatpush1.msra.mxu0 0.0
        %1207 = vmatprep.subr.mxu0 0.0
        %1208 = vmatpush1.msra.mxu0 0.0
        %1209 = vmatprep.subr.mxu0 0.0
        %1210 = vmatpush1.msra.mxu0 0.0
        %1211 = vmatprep.subr.mxu0 0.0
        %1212 = vmatpush1.msra.mxu0 0.0
        %1213 = vmatprep.subr.mxu0 0.0
        %1214 = vmatpush1.msra.mxu0 0.0
        %1215 = vmatprep.subr.mxu0 0.0
        %1216 = vmatpush1.msra.mxu0 0.0
        %1217 = vmatprep.subr.mxu0 0.0
        %1218 = vmatpush1.msra.mxu0 0.0
        %1219 = vmatprep.subr.mxu0 0.0
        %1220 = vmatpush1.msra.mxu0 0.0
        %1221 = vmatprep.subr.mxu0 0.0
        %1222 = vmatpush1.msra.mxu0 0.0
        %1223 = vmatprep.subr.mxu0 0.0
        %1224 = vmatpush1.msra.mxu0 0.0
        %1225 = vmatprep.subr.mxu0 0.0
        %1226 = vmatpush1.msra.mxu0 0.0
        %1227 = vmatprep.subr.mxu0 0.0
        %1228 = vmatpush1.msra.mxu0 0.0
        %1229 = vmatprep.subr.mxu0 0.0
        %1230 = vmatpush1.msra.mxu0 0.0
        %1231 = vmatprep.subr.mxu0 0.0
        %1232 = vmatpush1.msra.mxu0 0.0
        %1233 = vmatprep.subr.mxu0 0.0
        %1234 = vmatpush1.msra.mxu0 0.0
        %1235 = vmatprep.subr.mxu0 0.0
        %1236 = vmatpush1.msra.mxu0 0.0
        %1237 = vmatprep.subr.mxu0 0.0
        %1238 = vmatpush1.msra.mxu0 0.0
        %1239 = vmatprep.subr.mxu0 0.0
        %1240 = vmatpush1.msra.mxu0 0.0
        %1241 = vmatprep.subr.mxu0 0.0
        %1242 = vmatpush1.msra.mxu0 0.0
        %1243 = vmatprep.subr.mxu0 0.0
        %1244 = vmatpush1.msra.mxu0 0.0
        %1245 = vmatprep.subr.mxu0 0.0
        %1246 = vmatpush1.msra.mxu0 0.0
        %1247 = vmatprep.subr.mxu0 0.0
        %1248 = vmatpush1.msra.mxu0 0.0
        %1249 = vmatprep.subr.mxu0 0.0
        %1250 = vmatpush1.msra.mxu0 0.0
        %1251 = vmatprep.subr.mxu0 0.0
        %1252 = vmatpush1.msra.mxu0 0.0
        %1253 = vmatprep.subr.mxu0 0.0
        %1254 = vmatpush1.msra.mxu0 0.0
        %1255 = vmatprep.subr.mxu0 0.0
        %1256 = vmatpush1.msra.mxu0 0.0
        %1257 = vmatprep.mubr.f32.mxu0 0.0
        %1258 = vmatmul.mubr.f32.gmra.mrb[0].mxu0 %v1191
        %v1259 = vpop.f32.mrb[0].mxu0
        %v1260 = vadd.f32 %v1188, %v1259
        %v1261 = vpop.f32.mrb[0].mxu0
        %1262 = vdwg.mxu0
        %s1263 = scalar_lea.vmem [#allocation9], 16
        %v1264 = vld [vmem:[%s1263] sm:$0xff]
        %v1265 = vrot.slane %v1112, 2
        %v1266 = vsel %vm603, %v1265, 0
        %1268 = vmatprep.subr.mxu0 0.0
        %1269 = vmatpush1.msra.mxu0 %v1264
        %1270 = vmatprep.subr.mxu0 0.0
        %1271 = vmatpush1.msra.mxu0 0.0
        %1272 = vmatprep.subr.mxu0 0.0
        %1273 = vmatpush1.msra.mxu0 0.0
        %1274 = vmatprep.subr.mxu0 0.0
        %1275 = vmatpush1.msra.mxu0 0.0
        %1276 = vmatprep.subr.mxu0 0.0
        %1277 = vmatpush1.msra.mxu0 0.0
        %1278 = vmatprep.subr.mxu0 0.0
        %1279 = vmatpush1.msra.mxu0 0.0
        %1280 = vmatprep.subr.mxu0 0.0
        %1281 = vmatpush1.msra.mxu0 0.0
        %1282 = vmatprep.subr.mxu0 0.0
        %1283 = vmatpush1.msra.mxu0 0.0
        %1284 = vmatprep.subr.mxu0 0.0
        %1285 = vmatpush1.msra.mxu0 0.0
        %1286 = vmatprep.subr.mxu0 0.0
        %1287 = vmatpush1.msra.mxu0 0.0
        %1288 = vmatprep.subr.mxu0 0.0
        %1289 = vmatpush1.msra.mxu0 0.0
        %1290 = vmatprep.subr.mxu0 0.0
        %1291 = vmatpush1.msra.mxu0 0.0
        %1292 = vmatprep.subr.mxu0 0.0
        %1293 = vmatpush1.msra.mxu0 0.0
        %1294 = vmatprep.subr.mxu0 0.0
        %1295 = vmatpush1.msra.mxu0 0.0
        %1296 = vmatprep.subr.mxu0 0.0
        %1297 = vmatpush1.msra.mxu0 0.0
        %1298 = vmatprep.subr.mxu0 0.0
        %1299 = vmatpush1.msra.mxu0 0.0
        %1300 = vmatprep.subr.mxu0 0.0
        %1301 = vmatpush1.msra.mxu0 0.0
        %1302 = vmatprep.subr.mxu0 0.0
        %1303 = vmatpush1.msra.mxu0 0.0
        %1304 = vmatprep.subr.mxu0 0.0
        %1305 = vmatpush1.msra.mxu0 0.0
        %1306 = vmatprep.subr.mxu0 0.0
        %1307 = vmatpush1.msra.mxu0 0.0
        %1308 = vmatprep.subr.mxu0 0.0
        %1309 = vmatpush1.msra.mxu0 0.0
        %1310 = vmatprep.subr.mxu0 0.0
        %1311 = vmatpush1.msra.mxu0 0.0
        %1312 = vmatprep.subr.mxu0 0.0
        %1313 = vmatpush1.msra.mxu0 0.0
        %1314 = vmatprep.subr.mxu0 0.0
        %1315 = vmatpush1.msra.mxu0 0.0
        %1316 = vmatprep.subr.mxu0 0.0
        %1317 = vmatpush1.msra.mxu0 0.0
        %1318 = vmatprep.subr.mxu0 0.0
        %1319 = vmatpush1.msra.mxu0 0.0
        %1320 = vmatprep.subr.mxu0 0.0
        %1321 = vmatpush1.msra.mxu0 0.0
        %1322 = vmatprep.subr.mxu0 0.0
        %1323 = vmatpush1.msra.mxu0 0.0
        %1324 = vmatprep.subr.mxu0 0.0
        %1325 = vmatpush1.msra.mxu0 0.0
        %1326 = vmatprep.subr.mxu0 0.0
        %1327 = vmatpush1.msra.mxu0 0.0
        %1328 = vmatprep.subr.mxu0 0.0
        %1329 = vmatpush1.msra.mxu0 0.0
        %1330 = vmatprep.subr.mxu0 0.0
        %1331 = vmatpush1.msra.mxu0 0.0
        %1332 = vmatprep.mubr.f32.mxu0 0.0
        %1333 = vmatmul.mubr.f32.gmra.mrb[0].mxu0 %v1266
        %v1334 = vpop.f32.mrb[0].mxu0
        %v1335 = vadd.f32 0.0, %v1334
        %v1336 = vpop.f32.mrb[0].mxu0
        %1337 = vdwg.mxu0
        %v1338 = vadd.f32 %v1260, %v1335
        %s1339 = scalar_lea.vmem [#allocation9], 24
        %v1340 = vld [vmem:[%s1339] sm:$0xff]
        %v1341 = vrot.slane %v1112, 3
        %v1342 = vsel %vm603, %v1341, 0
        %1344 = vmatprep.subr.mxu0 0.0
        %1345 = vmatpush1.msra.mxu0 %v1340
        %1346 = vmatprep.subr.mxu0 0.0
        %1347 = vmatpush1.msra.mxu0 0.0
        %1348 = vmatprep.subr.mxu0 0.0
        %1349 = vmatpush1.msra.mxu0 0.0
        %1350 = vmatprep.subr.mxu0 0.0
        %1351 = vmatpush1.msra.mxu0 0.0
        %1352 = vmatprep.subr.mxu0 0.0
        %1353 = vmatpush1.msra.mxu0 0.0
        %1354 = vmatprep.subr.mxu0 0.0
        %1355 = vmatpush1.msra.mxu0 0.0
        %1356 = vmatprep.subr.mxu0 0.0
        %1357 = vmatpush1.msra.mxu0 0.0
        %1358 = vmatprep.subr.mxu0 0.0
        %1359 = vmatpush1.msra.mxu0 0.0
        %1360 = vmatprep.subr.mxu0 0.0
        %1361 = vmatpush1.msra.mxu0 0.0
        %1362 = vmatprep.subr.mxu0 0.0
        %1363 = vmatpush1.msra.mxu0 0.0
        %1364 = vmatprep.subr.mxu0 0.0
        %1365 = vmatpush1.msra.mxu0 0.0
        %1366 = vmatprep.subr.mxu0 0.0
        %1367 = vmatpush1.msra.mxu0 0.0
        %1368 = vmatprep.subr.mxu0 0.0
        %1369 = vmatpush1.msra.mxu0 0.0
        %1370 = vmatprep.subr.mxu0 0.0
        %1371 = vmatpush1.msra.mxu0 0.0
        %1372 = vmatprep.subr.mxu0 0.0
        %1373 = vmatpush1.msra.mxu0 0.0
        %1374 = vmatprep.subr.mxu0 0.0
        %1375 = vmatpush1.msra.mxu0 0.0
        %1376 = vmatprep.subr.mxu0 0.0
        %1377 = vmatpush1.msra.mxu0 0.0
        %1378 = vmatprep.subr.mxu0 0.0
        %1379 = vmatpush1.msra.mxu0 0.0
        %1380 = vmatprep.subr.mxu0 0.0
        %1381 = vmatpush1.msra.mxu0 0.0
        %1382 = vmatprep.subr.mxu0 0.0
        %1383 = vmatpush1.msra.mxu0 0.0
        %1384 = vmatprep.subr.mxu0 0.0
        %1385 = vmatpush1.msra.mxu0 0.0
        %1386 = vmatprep.subr.mxu0 0.0
        %1387 = vmatpush1.msra.mxu0 0.0
        %1388 = vmatprep.subr.mxu0 0.0
        %1389 = vmatpush1.msra.mxu0 0.0
        %1390 = vmatprep.subr.mxu0 0.0
        %1391 = vmatpush1.msra.mxu0 0.0
        %1392 = vmatprep.subr.mxu0 0.0
        %1393 = vmatpush1.msra.mxu0 0.0
        %1394 = vmatprep.subr.mxu0 0.0
        %1395 = vmatpush1.msra.mxu0 0.0
        %1396 = vmatprep.subr.mxu0 0.0
        %1397 = vmatpush1.msra.mxu0 0.0
        %1398 = vmatprep.subr.mxu0 0.0
        %1399 = vmatpush1.msra.mxu0 0.0
        %1400 = vmatprep.subr.mxu0 0.0
        %1401 = vmatpush1.msra.mxu0 0.0
        %1402 = vmatprep.subr.mxu0 0.0
        %1403 = vmatpush1.msra.mxu0 0.0
        %1404 = vmatprep.subr.mxu0 0.0
        %1405 = vmatpush1.msra.mxu0 0.0
        %1406 = vmatprep.subr.mxu0 0.0
        %1407 = vmatpush1.msra.mxu0 0.0
        %1408 = vmatprep.mubr.f32.mxu0 0.0
        %1409 = vmatmul.mubr.f32.gmra.mrb[0].mxu0 %v1342
        %v1410 = vpop.f32.mrb[0].mxu0
        %v1411 = vadd.f32 0.0, %v1410
        %v1412 = vpop.f32.mrb[0].mxu0
        %1413 = vdwg.mxu0
        %v1414 = vadd.f32 %v1338, %v1411
        %s1415 = scalar_lea.vmem [#allocation9], 32
        %v1416 = vld [vmem:[%s1415] sm:$0xff]
        %v1417 = vrot.slane %v1112, 4
        %v1418 = vsel %vm603, %v1417, 0
        %1420 = vmatprep.subr.mxu0 0.0
        %1421 = vmatpush1.msra.mxu0 %v1416
        %1422 = vmatprep.subr.mxu0 0.0
        %1423 = vmatpush1.msra.mxu0 0.0
        %1424 = vmatprep.subr.mxu0 0.0
        %1425 = vmatpush1.msra.mxu0 0.0
        %1426 = vmatprep.subr.mxu0 0.0
        %1427 = vmatpush1.msra.mxu0 0.0
        %1428 = vmatprep.subr.mxu0 0.0
        %1429 = vmatpush1.msra.mxu0 0.0
        %1430 = vmatprep.subr.mxu0 0.0
        %1431 = vmatpush1.msra.mxu0 0.0
        %1432 = vmatprep.subr.mxu0 0.0
        %1433 = vmatpush1.msra.mxu0 0.0
        %1434 = vmatprep.subr.mxu0 0.0
        %1435 = vmatpush1.msra.mxu0 0.0
        %1436 = vmatprep.subr.mxu0 0.0
        %1437 = vmatpush1.msra.mxu0 0.0
        %1438 = vmatprep.subr.mxu0 0.0
        %1439 = vmatpush1.msra.mxu0 0.0
        %1440 = vmatprep.subr.mxu0 0.0
        %1441 = vmatpush1.msra.mxu0 0.0
        %1442 = vmatprep.subr.mxu0 0.0
        %1443 = vmatpush1.msra.mxu0 0.0
        %1444 = vmatprep.subr.mxu0 0.0
        %1445 = vmatpush1.msra.mxu0 0.0
        %1446 = vmatprep.subr.mxu0 0.0
        %1447 = vmatpush1.msra.mxu0 0.0
        %1448 = vmatprep.subr.mxu0 0.0
        %1449 = vmatpush1.msra.mxu0 0.0
        %1450 = vmatprep.subr.mxu0 0.0
        %1451 = vmatpush1.msra.mxu0 0.0
        %1452 = vmatprep.subr.mxu0 0.0
        %1453 = vmatpush1.msra.mxu0 0.0
        %1454 = vmatprep.subr.mxu0 0.0
        %1455 = vmatpush1.msra.mxu0 0.0
        %1456 = vmatprep.subr.mxu0 0.0
        %1457 = vmatpush1.msra.mxu0 0.0
        %1458 = vmatprep.subr.mxu0 0.0
        %1459 = vmatpush1.msra.mxu0 0.0
        %1460 = vmatprep.subr.mxu0 0.0
        %1461 = vmatpush1.msra.mxu0 0.0
        %1462 = vmatprep.subr.mxu0 0.0
        %1463 = vmatpush1.msra.mxu0 0.0
        %1464 = vmatprep.subr.mxu0 0.0
        %1465 = vmatpush1.msra.mxu0 0.0
        %1466 = vmatprep.subr.mxu0 0.0
        %1467 = vmatpush1.msra.mxu0 0.0
        %1468 = vmatprep.subr.mxu0 0.0
        %1469 = vmatpush1.msra.mxu0 0.0
        %1470 = vmatprep.subr.mxu0 0.0
        %1471 = vmatpush1.msra.mxu0 0.0
        %1472 = vmatprep.subr.mxu0 0.0
        %1473 = vmatpush1.msra.mxu0 0.0
        %1474 = vmatprep.subr.mxu0 0.0
        %1475 = vmatpush1.msra.mxu0 0.0
        %1476 = vmatprep.subr.mxu0 0.0
        %1477 = vmatpush1.msra.mxu0 0.0
        %1478 = vmatprep.subr.mxu0 0.0
        %1479 = vmatpush1.msra.mxu0 0.0
        %1480 = vmatprep.subr.mxu0 0.0
        %1481 = vmatpush1.msra.mxu0 0.0
        %1482 = vmatprep.subr.mxu0 0.0
        %1483 = vmatpush1.msra.mxu0 0.0
        %1484 = vmatprep.mubr.f32.mxu0 0.0
        %1485 = vmatmul.mubr.f32.gmra.mrb[0].mxu0 %v1418
        %v1486 = vpop.f32.mrb[0].mxu0
        %v1487 = vadd.f32 0.0, %v1486
        %v1488 = vpop.f32.mrb[0].mxu0
        %1489 = vdwg.mxu0
        %v1490 = vadd.f32 %v1414, %v1487
        %s1491 = scalar_lea.vmem [#allocation9], 40
        %v1492 = vld [vmem:[%s1491] sm:$0xff]
        %v1493 = vrot.slane %v1112, 5
        %v1494 = vsel %vm603, %v1493, 0
        %1496 = vmatprep.subr.mxu0 0.0
        %1497 = vmatpush1.msra.mxu0 %v1492
        %1498 = vmatprep.subr.mxu0 0.0
        %1499 = vmatpush1.msra.mxu0 0.0
        %1500 = vmatprep.subr.mxu0 0.0
        %1501 = vmatpush1.msra.mxu0 0.0
        %1502 = vmatprep.subr.mxu0 0.0
        %1503 = vmatpush1.msra.mxu0 0.0
        %1504 = vmatprep.subr.mxu0 0.0
        %1505 = vmatpush1.msra.mxu0 0.0
        %1506 = vmatprep.subr.mxu0 0.0
        %1507 = vmatpush1.msra.mxu0 0.0
        %1508 = vmatprep.subr.mxu0 0.0
        %1509 = vmatpush1.msra.mxu0 0.0
        %1510 = vmatprep.subr.mxu0 0.0
        %1511 = vmatpush1.msra.mxu0 0.0
        %1512 = vmatprep.subr.mxu0 0.0
        %1513 = vmatpush1.msra.mxu0 0.0
        %1514 = vmatprep.subr.mxu0 0.0
        %1515 = vmatpush1.msra.mxu0 0.0
        %1516 = vmatprep.subr.mxu0 0.0
        %1517 = vmatpush1.msra.mxu0 0.0
        %1518 = vmatprep.subr.mxu0 0.0
        %1519 = vmatpush1.msra.mxu0 0.0
        %1520 = vmatprep.subr.mxu0 0.0
        %1521 = vmatpush1.msra.mxu0 0.0
        %1522 = vmatprep.subr.mxu0 0.0
        %1523 = vmatpush1.msra.mxu0 0.0
        %1524 = vmatprep.subr.mxu0 0.0
        %1525 = vmatpush1.msra.mxu0 0.0
        %1526 = vmatprep.subr.mxu0 0.0
        %1527 = vmatpush1.msra.mxu0 0.0
        %1528 = vmatprep.subr.mxu0 0.0
        %1529 = vmatpush1.msra.mxu0 0.0
        %1530 = vmatprep.subr.mxu0 0.0
        %1531 = vmatpush1.msra.mxu0 0.0
        %1532 = vmatprep.subr.mxu0 0.0
        %1533 = vmatpush1.msra.mxu0 0.0
        %1534 = vmatprep.subr.mxu0 0.0
        %1535 = vmatpush1.msra.mxu0 0.0
        %1536 = vmatprep.subr.mxu0 0.0
        %1537 = vmatpush1.msra.mxu0 0.0
        %1538 = vmatprep.subr.mxu0 0.0
        %1539 = vmatpush1.msra.mxu0 0.0
        %1540 = vmatprep.subr.mxu0 0.0
        %1541 = vmatpush1.msra.mxu0 0.0
        %1542 = vmatprep.subr.mxu0 0.0
        %1543 = vmatpush1.msra.mxu0 0.0
        %1544 = vmatprep.subr.mxu0 0.0
        %1545 = vmatpush1.msra.mxu0 0.0
        %1546 = vmatprep.subr.mxu0 0.0
        %1547 = vmatpush1.msra.mxu0 0.0
        %1548 = vmatprep.subr.mxu0 0.0
        %1549 = vmatpush1.msra.mxu0 0.0
        %1550 = vmatprep.subr.mxu0 0.0
        %1551 = vmatpush1.msra.mxu0 0.0
        %1552 = vmatprep.subr.mxu0 0.0
        %1553 = vmatpush1.msra.mxu0 0.0
        %1554 = vmatprep.subr.mxu0 0.0
        %1555 = vmatpush1.msra.mxu0 0.0
        %1556 = vmatprep.subr.mxu0 0.0
        %1557 = vmatpush1.msra.mxu0 0.0
        %1558 = vmatprep.subr.mxu0 0.0
        %1559 = vmatpush1.msra.mxu0 0.0
        %1560 = vmatprep.mubr.f32.mxu0 0.0
        %1561 = vmatmul.mubr.f32.gmra.mrb[0].mxu0 %v1494
        %v1562 = vpop.f32.mrb[0].mxu0
        %v1563 = vadd.f32 0.0, %v1562
        %v1564 = vpop.f32.mrb[0].mxu0
        %1565 = vdwg.mxu0
        %v1566 = vadd.f32 %v1490, %v1563
        %s1567 = scalar_lea.vmem [#allocation9], 48
        %v1568 = vld [vmem:[%s1567] sm:$0xff]
        %v1569 = vrot.slane %v1112, 6
        %v1570 = vsel %vm603, %v1569, 0
        %1572 = vmatprep.subr.mxu0 0.0
        %1573 = vmatpush1.msra.mxu0 %v1568
        %1574 = vmatprep.subr.mxu0 0.0
        %1575 = vmatpush1.msra.mxu0 0.0
        %1576 = vmatprep.subr.mxu0 0.0
        %1577 = vmatpush1.msra.mxu0 0.0
        %1578 = vmatprep.subr.mxu0 0.0
        %1579 = vmatpush1.msra.mxu0 0.0
        %1580 = vmatprep.subr.mxu0 0.0
        %1581 = vmatpush1.msra.mxu0 0.0
        %1582 = vmatprep.subr.mxu0 0.0
        %1583 = vmatpush1.msra.mxu0 0.0
        %1584 = vmatprep.subr.mxu0 0.0
        %1585 = vmatpush1.msra.mxu0 0.0
        %1586 = vmatprep.subr.mxu0 0.0
        %1587 = vmatpush1.msra.mxu0 0.0
        %1588 = vmatprep.subr.mxu0 0.0
        %1589 = vmatpush1.msra.mxu0 0.0
        %1590 = vmatprep.subr.mxu0 0.0
        %1591 = vmatpush1.msra.mxu0 0.0
        %1592 = vmatprep.subr.mxu0 0.0
        %1593 = vmatpush1.msra.mxu0 0.0
        %1594 = vmatprep.subr.mxu0 0.0
        %1595 = vmatpush1.msra.mxu0 0.0
        %1596 = vmatprep.subr.mxu0 0.0
        %1597 = vmatpush1.msra.mxu0 0.0
        %1598 = vmatprep.subr.mxu0 0.0
        %1599 = vmatpush1.msra.mxu0 0.0
        %1600 = vmatprep.subr.mxu0 0.0
        %1601 = vmatpush1.msra.mxu0 0.0
        %1602 = vmatprep.subr.mxu0 0.0
        %1603 = vmatpush1.msra.mxu0 0.0
        %1604 = vmatprep.subr.mxu0 0.0
        %1605 = vmatpush1.msra.mxu0 0.0
        %1606 = vmatprep.subr.mxu0 0.0
        %1607 = vmatpush1.msra.mxu0 0.0
        %1608 = vmatprep.subr.mxu0 0.0
        %1609 = vmatpush1.msra.mxu0 0.0
        %1610 = vmatprep.subr.mxu0 0.0
        %1611 = vmatpush1.msra.mxu0 0.0
        %1612 = vmatprep.subr.mxu0 0.0
        %1613 = vmatpush1.msra.mxu0 0.0
        %1614 = vmatprep.subr.mxu0 0.0
        %1615 = vmatpush1.msra.mxu0 0.0
        %1616 = vmatprep.subr.mxu0 0.0
        %1617 = vmatpush1.msra.mxu0 0.0
        %1618 = vmatprep.subr.mxu0 0.0
        %1619 = vmatpush1.msra.mxu0 0.0
        %1620 = vmatprep.subr.mxu0 0.0
        %1621 = vmatpush1.msra.mxu0 0.0
        %1622 = vmatprep.subr.mxu0 0.0
        %1623 = vmatpush1.msra.mxu0 0.0
        %1624 = vmatprep.subr.mxu0 0.0
        %1625 = vmatpush1.msra.mxu0 0.0
        %1626 = vmatprep.subr.mxu0 0.0
        %1627 = vmatpush1.msra.mxu0 0.0
        %1628 = vmatprep.subr.mxu0 0.0
        %1629 = vmatpush1.msra.mxu0 0.0
        %1630 = vmatprep.subr.mxu0 0.0
        %1631 = vmatpush1.msra.mxu0 0.0
        %1632 = vmatprep.subr.mxu0 0.0
        %1633 = vmatpush1.msra.mxu0 0.0
        %1634 = vmatprep.subr.mxu0 0.0
        %1635 = vmatpush1.msra.mxu0 0.0
        %1636 = vmatprep.mubr.f32.mxu0 0.0
        %1637 = vmatmul.mubr.f32.gmra.mrb[0].mxu0 %v1570
        %v1638 = vpop.f32.mrb[0].mxu0
        %v1639 = vadd.f32 0.0, %v1638
        %v1640 = vpop.f32.mrb[0].mxu0
        %1641 = vdwg.mxu0
        %v1642 = vadd.f32 %v1566, %v1639
        %s1643 = scalar_lea.vmem [#allocation9], 56
        %v1644 = vld [vmem:[%s1643] sm:$0xff]
        %v1645 = vrot.slane %v1112, 7
        %v1646 = vsel %vm603, %v1645, 0
        %1648 = vmatprep.subr.mxu0 0.0
        %1649 = vmatpush1.msra.mxu0 %v1644
        %1650 = vmatprep.subr.mxu0 0.0
        %1651 = vmatpush1.msra.mxu0 0.0
        %1652 = vmatprep.subr.mxu0 0.0
        %1653 = vmatpush1.msra.mxu0 0.0
        %1654 = vmatprep.subr.mxu0 0.0
        %1655 = vmatpush1.msra.mxu0 0.0
        %1656 = vmatprep.subr.mxu0 0.0
        %1657 = vmatpush1.msra.mxu0 0.0
        %1658 = vmatprep.subr.mxu0 0.0
        %1659 = vmatpush1.msra.mxu0 0.0
        %1660 = vmatprep.subr.mxu0 0.0
        %1661 = vmatpush1.msra.mxu0 0.0
        %1662 = vmatprep.subr.mxu0 0.0
        %1663 = vmatpush1.msra.mxu0 0.0
        %1664 = vmatprep.subr.mxu0 0.0
        %1665 = vmatpush1.msra.mxu0 0.0
        %1666 = vmatprep.subr.mxu0 0.0
        %1667 = vmatpush1.msra.mxu0 0.0
        %1668 = vmatprep.subr.mxu0 0.0
        %1669 = vmatpush1.msra.mxu0 0.0
        %1670 = vmatprep.subr.mxu0 0.0
        %1671 = vmatpush1.msra.mxu0 0.0
        %1672 = vmatprep.subr.mxu0 0.0
        %1673 = vmatpush1.msra.mxu0 0.0
        %1674 = vmatprep.subr.mxu0 0.0
        %1675 = vmatpush1.msra.mxu0 0.0
        %1676 = vmatprep.subr.mxu0 0.0
        %1677 = vmatpush1.msra.mxu0 0.0
        %1678 = vmatprep.subr.mxu0 0.0
        %1679 = vmatpush1.msra.mxu0 0.0
        %1680 = vmatprep.subr.mxu0 0.0
        %1681 = vmatpush1.msra.mxu0 0.0
        %1682 = vmatprep.subr.mxu0 0.0
        %1683 = vmatpush1.msra.mxu0 0.0
        %1684 = vmatprep.subr.mxu0 0.0
        %1685 = vmatpush1.msra.mxu0 0.0
        %1686 = vmatprep.subr.mxu0 0.0
        %1687 = vmatpush1.msra.mxu0 0.0
        %1688 = vmatprep.subr.mxu0 0.0
        %1689 = vmatpush1.msra.mxu0 0.0
        %1690 = vmatprep.subr.mxu0 0.0
        %1691 = vmatpush1.msra.mxu0 0.0
        %1692 = vmatprep.subr.mxu0 0.0
        %1693 = vmatpush1.msra.mxu0 0.0
        %1694 = vmatprep.subr.mxu0 0.0
        %1695 = vmatpush1.msra.mxu0 0.0
        %1696 = vmatprep.subr.mxu0 0.0
        %1697 = vmatpush1.msra.mxu0 0.0
        %1698 = vmatprep.subr.mxu0 0.0
        %1699 = vmatpush1.msra.mxu0 0.0
        %1700 = vmatprep.subr.mxu0 0.0
        %1701 = vmatpush1.msra.mxu0 0.0
        %1702 = vmatprep.subr.mxu0 0.0
        %1703 = vmatpush1.msra.mxu0 0.0
        %1704 = vmatprep.subr.mxu0 0.0
        %1705 = vmatpush1.msra.mxu0 0.0
        %1706 = vmatprep.subr.mxu0 0.0
        %1707 = vmatpush1.msra.mxu0 0.0
        %1708 = vmatprep.subr.mxu0 0.0
        %1709 = vmatpush1.msra.mxu0 0.0
        %1710 = vmatprep.subr.mxu0 0.0
        %1711 = vmatpush1.msra.mxu0 0.0
        %1712 = vmatprep.mubr.f32.mxu0 0.0
        %1713 = vmatmul.mubr.f32.gmra.mrb[0].mxu0 %v1646
        %v1714 = vpop.f32.mrb[0].mxu0
        %v1715 = vadd.f32 0.0, %v1714
        %v1716 = vpop.f32.mrb[0].mxu0
        %1717 = vdwg.mxu0
        %v1718 = vadd.f32 %v1642, %v1715
        %v1719 = vadd.f32 %v1718, %v1113
        %v1720 = vmax.f32 %v1719, 0.0
        %v1721 = vld [vmem:[%s10] sm:$0xff]
        %v1722 = vld [vmem:[%s10 + $0x8] sm:$0xff]
        %v1723 = vld [vmem:[%s11] sm:$0x1]
        %vm1724 = vcmask 130048
        %v1726 = vsel %vm1724, %v1720, 0
        %1728 = vmatprep.subr.mxu0 0.0
        %1729 = vmatpush1.msra.mxu0 %v1721
        %1730 = vmatprep.subr.mxu0 0.0
        %1731 = vmatpush1.msra.mxu0 %v1722
        %1732 = vmatprep.subr.mxu0 0.0
        %1733 = vmatpush1.msra.mxu0 0.0
        %1734 = vmatprep.subr.mxu0 0.0
        %1735 = vmatpush1.msra.mxu0 0.0
        %1736 = vmatprep.subr.mxu0 0.0
        %1737 = vmatpush1.msra.mxu0 0.0
        %1738 = vmatprep.subr.mxu0 0.0
        %1739 = vmatpush1.msra.mxu0 0.0
        %1740 = vmatprep.subr.mxu0 0.0
        %1741 = vmatpush1.msra.mxu0 0.0
        %1742 = vmatprep.subr.mxu0 0.0
        %1743 = vmatpush1.msra.mxu0 0.0
        %1744 = vmatprep.subr.mxu0 0.0
        %1745 = vmatpush1.msra.mxu0 0.0
        %1746 = vmatprep.subr.mxu0 0.0
        %1747 = vmatpush1.msra.mxu0 0.0
        %1748 = vmatprep.subr.mxu0 0.0
        %1749 = vmatpush1.msra.mxu0 0.0
        %1750 = vmatprep.subr.mxu0 0.0
        %1751 = vmatpush1.msra.mxu0 0.0
        %1752 = vmatprep.subr.mxu0 0.0
        %1753 = vmatpush1.msra.mxu0 0.0
        %1754 = vmatprep.subr.mxu0 0.0
        %1755 = vmatpush1.msra.mxu0 0.0
        %1756 = vmatprep.subr.mxu0 0.0
        %1757 = vmatpush1.msra.mxu0 0.0
        %1758 = vmatprep.subr.mxu0 0.0
        %1759 = vmatpush1.msra.mxu0 0.0
        %1760 = vmatprep.subr.mxu0 0.0
        %1761 = vmatpush1.msra.mxu0 0.0
        %1762 = vmatprep.subr.mxu0 0.0
        %1763 = vmatpush1.msra.mxu0 0.0
        %1764 = vmatprep.subr.mxu0 0.0
        %1765 = vmatpush1.msra.mxu0 0.0
        %1766 = vmatprep.subr.mxu0 0.0
        %1767 = vmatpush1.msra.mxu0 0.0
        %1768 = vmatprep.subr.mxu0 0.0
        %1769 = vmatpush1.msra.mxu0 0.0
        %1770 = vmatprep.subr.mxu0 0.0
        %1771 = vmatpush1.msra.mxu0 0.0
        %1772 = vmatprep.subr.mxu0 0.0
        %1773 = vmatpush1.msra.mxu0 0.0
        %1774 = vmatprep.subr.mxu0 0.0
        %1775 = vmatpush1.msra.mxu0 0.0
        %1776 = vmatprep.subr.mxu0 0.0
        %1777 = vmatpush1.msra.mxu0 0.0
        %1778 = vmatprep.subr.mxu0 0.0
        %1779 = vmatpush1.msra.mxu0 0.0
        %1780 = vmatprep.subr.mxu0 0.0
        %1781 = vmatpush1.msra.mxu0 0.0
        %1782 = vmatprep.subr.mxu0 0.0
        %1783 = vmatpush1.msra.mxu0 0.0
        %1784 = vmatprep.subr.mxu0 0.0
        %1785 = vmatpush1.msra.mxu0 0.0
        %1786 = vmatprep.subr.mxu0 0.0
        %1787 = vmatpush1.msra.mxu0 0.0
        %1788 = vmatprep.subr.mxu0 0.0
        %1789 = vmatpush1.msra.mxu0 0.0
        %1790 = vmatprep.subr.mxu0 0.0
        %1791 = vmatpush1.msra.mxu0 0.0
        %1792 = vmatprep.mubr.f32.mxu0 0.0
        %1793 = vmatmul.mubr.f32.gmra.mrb[0].mxu0 %v1726
        %v1794 = vpop.f32.mrb[0].mxu0
        %v1795 = vadd.f32 %v1723, %v1794
        %v1796 = vpop.f32.mrb[0].mxu0
        %1797 = vdwg.mxu0
        %v1798 = vmax.f32 %v1795, 0.0
        %v1799 = vld [vmem:[%s12] sm:$0xff]
        %v1800 = vld [vmem:[%s12 + $0x8] sm:$0xff]
        %v1801 = vld [vmem:[%s13] sm:$0x1]
        %v1803 = vsel %vm1724, %v1798, 0
        %1805 = vmatprep.subr.mxu0 0.0
        %1806 = vmatpush1.msra.mxu0 %v1799
        %1807 = vmatprep.subr.mxu0 0.0
        %1808 = vmatpush1.msra.mxu0 %v1800
        %1809 = vmatprep.subr.mxu0 0.0
        %1810 = vmatpush1.msra.mxu0 0.0
        %1811 = vmatprep.subr.mxu0 0.0
        %1812 = vmatpush1.msra.mxu0 0.0
        %1813 = vmatprep.subr.mxu0 0.0
        %1814 = vmatpush1.msra.mxu0 0.0
        %1815 = vmatprep.subr.mxu0 0.0
        %1816 = vmatpush1.msra.mxu0 0.0
        %1817 = vmatprep.subr.mxu0 0.0
        %1818 = vmatpush1.msra.mxu0 0.0
        %1819 = vmatprep.subr.mxu0 0.0
        %1820 = vmatpush1.msra.mxu0 0.0
        %1821 = vmatprep.subr.mxu0 0.0
        %1822 = vmatpush1.msra.mxu0 0.0
        %1823 = vmatprep.subr.mxu0 0.0
        %1824 = vmatpush1.msra.mxu0 0.0
        %1825 = vmatprep.subr.mxu0 0.0
        %1826 = vmatpush1.msra.mxu0 0.0
        %1827 = vmatprep.subr.mxu0 0.0
        %1828 = vmatpush1.msra.mxu0 0.0
        %1829 = vmatprep.subr.mxu0 0.0
        %1830 = vmatpush1.msra.mxu0 0.0
        %1831 = vmatprep.subr.mxu0 0.0
        %1832 = vmatpush1.msra.mxu0 0.0
        %1833 = vmatprep.subr.mxu0 0.0
        %1834 = vmatpush1.msra.mxu0 0.0
        %1835 = vmatprep.subr.mxu0 0.0
        %1836 = vmatpush1.msra.mxu0 0.0
        %1837 = vmatprep.subr.mxu0 0.0
        %1838 = vmatpush1.msra.mxu0 0.0
        %1839 = vmatprep.subr.mxu0 0.0
        %1840 = vmatpush1.msra.mxu0 0.0
        %1841 = vmatprep.subr.mxu0 0.0
        %1842 = vmatpush1.msra.mxu0 0.0
        %1843 = vmatprep.subr.mxu0 0.0
        %1844 = vmatpush1.msra.mxu0 0.0
        %1845 = vmatprep.subr.mxu0 0.0
        %1846 = vmatpush1.msra.mxu0 0.0
        %1847 = vmatprep.subr.mxu0 0.0
        %1848 = vmatpush1.msra.mxu0 0.0
        %1849 = vmatprep.subr.mxu0 0.0
        %1850 = vmatpush1.msra.mxu0 0.0
        %1851 = vmatprep.subr.mxu0 0.0
        %1852 = vmatpush1.msra.mxu0 0.0
        %1853 = vmatprep.subr.mxu0 0.0
        %1854 = vmatpush1.msra.mxu0 0.0
        %1855 = vmatprep.subr.mxu0 0.0
        %1856 = vmatpush1.msra.mxu0 0.0
        %1857 = vmatprep.subr.mxu0 0.0
        %1858 = vmatpush1.msra.mxu0 0.0
        %1859 = vmatprep.subr.mxu0 0.0
        %1860 = vmatpush1.msra.mxu0 0.0
        %1861 = vmatprep.subr.mxu0 0.0
        %1862 = vmatpush1.msra.mxu0 0.0
        %1863 = vmatprep.subr.mxu0 0.0
        %1864 = vmatpush1.msra.mxu0 0.0
        %1865 = vmatprep.subr.mxu0 0.0
        %1866 = vmatpush1.msra.mxu0 0.0
        %1867 = vmatprep.subr.mxu0 0.0
        %1868 = vmatpush1.msra.mxu0 0.0
        %1869 = vmatprep.mubr.f32.mxu0 0.0
        %1870 = vmatmul.mubr.f32.gmra.mrb[0].mxu0 %v1803
        %v1871 = vpop.f32.mrb[0].mxu0
        %v1872 = vadd.f32 %v1801, %v1871
        %v1873 = vpop.f32.mrb[0].mxu0
        %1874 = vdwg.mxu0
        %v1875 = vand.u32 2147483647, %v590
        %vm1876 = vcmask 253952
        %v1877 = vsel %vm1876, %v1875, 0.0
        %1878 = vadd.xlane.f32.xlu0 %v1877
        %v1879 = vpop.xlane.xlu0 %1878
        %v1880 = vadd.f32 %v1879, 1.0
        %v1881 = vlog2.pop %v1880
        %v1882 = vmul.f32 %v1881, 0.6931472
        %v1883 = vadd.f32 %v1872, %v1882
        %vm1884 = vcmask 24576
        %1885 = vst.msk [vmem:[%s583] sm:$0x1] %vm1884, %v1883
        %s1886 = sand.u32 %s350, 1
        %s1887 = scalar_lea.sflag [#allocation5], %s1886
        %s1888 = sand.u32 %s350, 1
        %s1889 = smul.addr %s1888, 4
        %s1890 = scalar_lea.vmem [#allocation12], %s1889
        %s1891 = sand.u32 %s376, 1
        %s1892 = scalar_lea.sflag [#allocation14], %s1891
        %s1893 = sand.u32 %s376, 1
        %s1894 = scalar_lea.vmem [#allocation13], %s1893
        // Predicated region
        $region97: #{tpu_custom_call.1} parent=75 // pred_check
          %p1895 = pneg %p360
        $region98: #{tpu_custom_call.1} parent=75 // pred_check_branch
          %1897 = sbr.rel (%p1895) target = $region100
        $region99: #{tpu_custom_call.1} parent=75 // pred_region
          %s1899 = ssub.s32 64, 64
          %1900 = vsyncadd %s1887, %s1899
          %s1901 = smul.addr %s38, 64
          %s1902 = scalar_lea.hbm %s14, %s1901
          %s1904 = sshll.u32 %s1890, 4
          %s1905 = int_to_ptr.vmem [resolvable:$true] %s1904
          %1907 = dma.vmem_to_hbm [thread:$0]  %s1905, 64, %s1902, %s1887
        $region100: #{tpu_custom_call.1} parent=75 // pred_fallthru
          _
        // Predicated region
        $region101: #{tpu_custom_call.1} parent=75 // pred_check
          %p1908 = pneg %p386
        $region102: #{tpu_custom_call.1} parent=75 // pred_check_branch
          %1910 = sbr.rel (%p1908) target = $region104
        $region103: #{tpu_custom_call.1} parent=75 // pred_region
          %s1912 = ssub.s32 16, 16
          %1913 = vsyncadd %s1892, %s1912
          %s1914 = smul.addr %s38, 16
          %s1915 = scalar_lea.hbm %s15, %s1914
          %s1917 = sshll.u32 %s1894, 4
          %s1918 = int_to_ptr.vmem [resolvable:$true] %s1917
          %1920 = dma.vmem_to_hbm [thread:$0]  %s1918, 16, %s1915, %s1892
        $region104: #{tpu_custom_call.1} parent=75 // pred_fallthru
          _
      $region76: #{tpu_custom_call.1} parent=5 // pred_fallthru
        _
      %p1921 = scmp.le.s32.totalorder 2, %s33
      // Predicated region
      $region105: #{tpu_custom_call.1} parent=5 // pred_check
        %p1922 = pneg %p1921
      $region106: #{tpu_custom_call.1} parent=5 // pred_check_branch
        %1924 = sbr.rel (%p1922) target = $region108
      $region107: #{tpu_custom_call.1} parent=5 // pred_region
        %s1925 = ssub.s32 %s33, 2
        // Predicated region
        $region109: #{tpu_custom_call.1} parent=107 // pred_check
          %p1926 = pneg %p366
        $region110: #{tpu_custom_call.1} parent=107 // pred_check_branch
          %1928 = sbr.rel (%p1926) target = $region112
        $region111: #{tpu_custom_call.1} parent=107 // pred_region
          %s1929 = sand.u32 %s351, 1
          %s1930 = scalar_lea.sflag [#allocation5], %s1929
          %s1931 = sand.u32 %s351, 1
          %s1932 = smul.addr %s1931, 4
          %s1933 = scalar_lea.vmem [#allocation12], %s1932
          %1934 = dma.done %s1930, 64
        $region112: #{tpu_custom_call.1} parent=107 // pred_fallthru
          _
        // Predicated region
        $region113: #{tpu_custom_call.1} parent=107 // pred_check
          %p1935 = pneg %p392
        $region114: #{tpu_custom_call.1} parent=107 // pred_check_branch
          %1937 = sbr.rel (%p1935) target = $region116
        $region115: #{tpu_custom_call.1} parent=107 // pred_region
          %s1938 = sand.u32 %s377, 1
          %s1939 = scalar_lea.sflag [#allocation14], %s1938
          %s1940 = sand.u32 %s377, 1
          %s1941 = scalar_lea.vmem [#allocation13], %s1940
          %1942 = dma.done %s1939, 16
        $region116: #{tpu_custom_call.1} parent=107 // pred_fallthru
          _
      $region108: #{tpu_custom_call.1} parent=5 // pred_fallthru
        _
    $region6: #{tpu_custom_call.1} parent=1 // loop_footer
      %s37 = sadd.s32 1, %s33
    $region7: #{tpu_custom_call.1} parent=1 // loop_footer_branch
      %32 = sbr.rel target = $region3
    $region8: #{tpu_custom_call.1} parent=1 // loop_exit
      _
    %1943 = vsyncpa [#allocation4], 1
    %s1944 = scalar_lea.sflag [#allocation4], 1
    %1945 = vsyncpa %s1944, 1
    %1946 = vsyncpa [#allocation7], 1
    %1947 = vsyncpa [#allocation10], 1
    %1948 = vsyncpa [#allocation5], 1
    %s1949 = scalar_lea.sflag [#allocation5], 1
    %1950 = vsyncpa %s1949, 1
    %1951 = vsyncpa [#allocation14], 1
    %s1952 = scalar_lea.sflag [#allocation14], 1
    %1953 = vsyncpa %s1952, 1

</llo_original>
